<compile_context>
chip_gen: v6e
topology: v6e:2x2x1
jax: 0.10.0
libtpu: 0.0.40
codegen_flags: <defaults>
</compile_context>

<pallas_src>
import functools

import jax
import jax.numpy as jnp
from jax.experimental import pallas as pl
from jax.experimental.pallas import tpu as pltpu


def _round_up(x, m):
  return ((x + m - 1) // m) * m


def _slab_rows(hp, ydim_p):
  """Static row offsets inside packed slab A (all offsets multiples of 8)."""
  r = {}
  r["w1"] = 0                    # (3 -> 8 rows, hp)
  r["w2"] = r["w1"] + 8          # (hp, hp)
  r["w3x"] = r["w2"] + hp        # (3 -> 8 rows, hp)
  r["w3g"] = r["w3x"] + 8        # (hp, hp)
  r["w3m"] = r["w3g"] + hp       # (ydim_p, hp)
  r["v1"] = r["w3m"] + ydim_p    # (3 -> 8 rows, hp)
  r["v2"] = r["v1"] + 8          # (hp, hp)
  r["v3"] = r["v2"] + hp         # (hp, hp)
  r["b"] = r["v3"] + hp          # 8 bias rows: b1,b2,b3,c1,c2,c3,0,0
  r["total"] = r["b"] + 8
  return r


# ------------------------- in-kernel math helpers ---------------------------


def _encoder_pool(x, w1, b1, w2, b2):
  f32 = jnp.float32
  h1 = jnp.maximum(jnp.dot(x, w1, preferred_element_type=f32) + b1, 0.0)
  h2 = jnp.maximum(jnp.dot(h1, w2, preferred_element_type=f32) + b2, 0.0)
  return jnp.max(h2, axis=0, keepdims=True)                       # (1, hp)


def _offset_head(x, m, g, w3x, w3g, w3m, b3, w4, b4):
  f32 = jnp.float32
  fused = (jnp.dot(g, w3g, preferred_element_type=f32)
           + jnp.dot(m, w3m, preferred_element_type=f32) + b3)    # (1, hp)
  h3 = jnp.maximum(jnp.dot(x, w3x, preferred_element_type=f32) + fused, 0.0)
  off = jnp.dot(h3, w4, preferred_element_type=f32) + b4          # (ns, 128)
  return x + off[:, 0:3]                                          # (ns, 3)


def _decoder_pool(enc, v1, c1, v2, c2):
  f32 = jnp.float32
  d1 = jnp.maximum(jnp.dot(enc, v1, preferred_element_type=f32) + c1, 0.0)
  d2 = jnp.maximum(jnp.dot(d1, v2, preferred_element_type=f32) + c2, 0.0)
  return jnp.max(d2, axis=0, keepdims=True)                       # (1, hp)


def _decoder_head(gd, v3, c3, v4, c4):
  f32 = jnp.float32
  d3 = jnp.maximum(jnp.dot(gd, v3, preferred_element_type=f32) + c3, 0.0)
  return jnp.dot(d3, v4, preferred_element_type=f32) + c4         # (.., 128)


# ------------------------------ kernel bodies -------------------------------


def pointnet2_ed_single_pass_kernel(
    xyz_ref, msg_ref, wa_ref, wb_ref,     # inputs
    enc_ref, dec_ref,                     # outputs
    *, bt, hp, ydim_p,
):
  """Whole point cloud of a batch chunk in one grid step (common case)."""
  f32 = jnp.float32
  r = _slab_rows(hp, ydim_p)

  bias = wa_ref[r["b"]:r["b"] + 8, :]
  b1, b2, b3 = bias[0:1, :], bias[1:2, :], bias[2:3, :]
  c1, c2, c3 = bias[3:4, :], bias[4:5, :], bias[5:6, :]
  w1 = wa_ref[r["w1"]:r["w1"] + 8, :][0:3, :]
  w2 = wa_ref[r["w2"]:r["w2"] + hp, :]
  w3x = wa_ref[r["w3x"]:r["w3x"] + 8, :][0:3, :]
  w3g = wa_ref[r["w3g"]:r["w3g"] + hp, :]
  w3m = wa_ref[r["w3m"]:r["w3m"] + ydim_p, :]
  v1 = wa_ref[r["v1"]:r["v1"] + 8, :][0:3, :]
  v2 = wa_ref[r["v2"]:r["v2"] + hp, :]
  v3 = wa_ref[r["v3"]:r["v3"] + hp, :]
  w4 = wb_ref[0:hp, :]
  v4 = wb_ref[hp:2 * hp, :]
  obias = wb_ref[2 * hp:2 * hp + 8, :]
  b4, c4 = obias[0:1, :], obias[1:2, :]

  for i in range(bt):                       # static unroll over batches
    x = xyz_ref[i].astype(f32)              # (N, 3)
    m = msg_ref[i].astype(f32)              # (1, ydim_p)
    g = _encoder_pool(x, w1, b1, w2, b2)    # (1, hp) exact global max-pool
    enc = _offset_head(x, m, g, w3x, w3g, w3m, b3, w4, b4)
    enc_ref[i] = enc.astype(enc_ref.dtype)
    gd = _decoder_pool(enc, v1, c1, v2, c2)
    dec = _decoder_head(gd, v3, c3, v4, c4)                       # (1, 128)
    dec_ref[i] = dec[:, 0:ydim_p].astype(dec_ref.dtype)


def pointnet2_ed_two_pass_kernel(
    xyz_ref, msg_ref, wa_ref, wb_ref,     # inputs
    enc_ref, dec_ref,                     # outputs
    g_enc, g_dec,                         # VMEM scratch: running max-pool feats
    *, bt, hp, ydim_p,
):
  """Streaming fallback for large N: pass 0 = encoder pooling, pass 1 = rest."""
  f32 = jnp.float32
  r = _slab_rows(hp, ydim_p)
  p = pl.program_id(1)            # 0: encoder pooling pass, 1: offset + decode
  nt = pl.program_id(2)           # N-tile index
  last_nt = pl.num_programs(2) - 1
  bias = wa_ref[r["b"]:r["b"] + 8, :]

  @pl.when(jnp.logical_and(p == 0, nt == 0))
  def _init():
    # relu outputs are >= 0, so a 0-init keeps the running max exact.
    g_enc[...] = jnp.zeros_like(g_enc)
    g_dec[...] = jnp.zeros_like(g_dec)

  @pl.when(p == 0)
  def _encoder_pool_pass():
    w1 = wa_ref[r["w1"]:r["w1"] + 8, :][0:3, :]
    w2 = wa_ref[r["w2"]:r["w2"] + hp, :]
    b1, b2 = bias[0:1, :], bias[1:2, :]
    for i in range(bt):                         # static unroll over batches
      x = xyz_ref[i].astype(f32)                # (ns, 3)
      g_enc[i:i + 1, :] = jnp.maximum(g_enc[i:i + 1, :],
                                      _encoder_pool(x, w1, b1, w2, b2))
      enc_ref[i] = x.astype(enc_ref.dtype)      # placeholder; rewritten pass 1

  @pl.when(p == 1)
  def _offset_and_decode_pass():
    w3x = wa_ref[r["w3x"]:r["w3x"] + 8, :][0:3, :]
    w3g = wa_ref[r["w3g"]:r["w3g"] + hp, :]
    w3m = wa_ref[r["w3m"]:r["w3m"] + ydim_p, :]
    v1 = wa_ref[r["v1"]:r["v1"] + 8, :][0:3, :]
    v2 = wa_ref[r["v2"]:r["v2"] + hp, :]
    b3, c1, c2 = bias[2:3, :], bias[3:4, :], bias[4:5, :]
    w4 = wb_ref[0:hp, :]
    obias = wb_ref[2 * hp:2 * hp + 8, :]
    b4 = obias[0:1, :]

    for i in range(bt):                         # static unroll over batches
      x = xyz_ref[i].astype(f32)                # (ns, 3)
      m = msg_ref[i].astype(f32)                # (1, ydim_p)
      g = g_enc[i:i + 1, :]                     # (1, hp) global max (all tiles)
      enc = _offset_head(x, m, g, w3x, w3g, w3m, b3, w4, b4)
      enc_ref[i] = enc.astype(enc_ref.dtype)
      g_dec[i:i + 1, :] = jnp.maximum(g_dec[i:i + 1, :],
                                      _decoder_pool(enc, v1, c1, v2, c2))

    @pl.when(nt == last_nt)
    def _decoder_head_final():
      v3 = wa_ref[r["v3"]:r["v3"] + hp, :]
      c3 = bias[5:6, :]
      v4 = wb_ref[hp:2 * hp, :]
      c4 = obias[1:2, :]
      dec = _decoder_head(g_dec[...], v3, c3, v4, c4)              # (bt, 128)
      dec_ref[...] = dec[:, None, 0:ydim_p].astype(dec_ref.dtype)


# ----------------------------- host-side packing ----------------------------


def _pack_params(params, hp, ydim_p):
  """Pack the 18 parameter tensors into two lane-dense, zero-padded slabs."""
  (w1, b1, w2, b2, w3x, w3g, w3m, b3, w4, b4,
   v1, c1, v2, c2, v3, c3, v4, c4) = [p.astype(jnp.float32) for p in params]

  def seg(w, rows):
    return jnp.pad(w, ((0, rows - w.shape[0]), (0, hp - w.shape[1])))

  def brow(b):
    b = b.reshape(1, -1)
    return jnp.pad(b, ((0, 0), (0, hp - b.shape[1])))

  wa = jnp.concatenate([
      seg(w1, 8), seg(w2, hp), seg(w3x, 8), seg(w3g, hp), seg(w3m, ydim_p),
      seg(v1, 8), seg(v2, hp), seg(v3, hp),
      brow(b1), brow(b2), brow(b3), brow(c1), brow(c2), brow(c3),
      jnp.zeros((2, hp), jnp.float32),
  ], axis=0)                                     # (32 + 4*hp + ydim_p, hp)

  cp = 128                                       # lane-dense output-head slab

  def oseg(w, rows):
    return jnp.pad(w, ((0, rows - w.shape[0]), (0, cp - w.shape[1])))

  def orow(b):
    b = b.reshape(1, -1)
    return jnp.pad(b, ((0, 0), (0, cp - b.shape[1])))

  wb = jnp.concatenate([
      oseg(w4, hp), oseg(v4, hp), orow(b4), orow(c4),
      jnp.zeros((6, cp), jnp.float32),
  ], axis=0)                                     # (2*hp + 8, 128)
  return wa, wb


def init_params(key, ydim, hidden):
  ks = jax.random.split(key, 20)
  s = 0.1
  f32 = jnp.float32

  def w(k, shape):
    return (s * jax.random.normal(k, shape)).astype(f32)

  params = dict(
      # encoder
      w1=w(ks[0], (3, hidden)),        b1=jnp.zeros((1, hidden), f32),
      w2=w(ks[1], (hidden, hidden)),   b2=jnp.zeros((1, hidden), f32),
      w3x=w(ks[2], (3, hidden)),
      w3g=w(ks[3], (hidden, hidden)),
      w3m=w(ks[4], (ydim, hidden)),    b3=jnp.zeros((1, hidden), f32),
      w4=w(ks[5], (hidden, 3)),        b4=jnp.zeros((1, 3), f32),
      # decoder
      v1=w(ks[6], (3, hidden)),        c1=jnp.zeros((1, hidden), f32),
      v2=w(ks[7], (hidden, hidden)),   c2=jnp.zeros((1, hidden), f32),
      v3=w(ks[8], (hidden, hidden)),   c3=jnp.zeros((1, hidden), f32),
      v4=w(ks[9], (hidden, ydim)),     c4=jnp.zeros((1, ydim), f32),
  )
  order = ["w1", "b1", "w2", "b2", "w3x", "w3g", "w3m", "b3", "w4", "b4",
           "v1", "c1", "v2", "c2", "v3", "c3", "v4", "c4"]
  return [params[k] for k in order]


# --------------------------------- wrapper -----------------------------------


@jax.jit
def pointnet2_ed(xyz, faces, msg, idx, *params):
  del faces, idx                       # unused, as in the reference forward
  B, N, _ = xyz.shape
  ydim = msg.shape[-1]
  hidden = params[0].shape[-1]         # w1: (3, hidden)
  hp = _round_up(max(hidden, 128), 128)   # pad hidden to full lane width
  ydim_p = _round_up(ydim, 8)

  wa, wb = _pack_params(params, hp, ydim_p)
  msg3 = jnp.pad(msg.astype(jnp.float32),
                 ((0, 0), (0, ydim_p - ydim))).reshape(B, 1, ydim_p)

  # Batch chunking: keep >= 2 "parallel" chunks so both v7x TensorCores get
  # work; coarsen moderately (several batches per chunk) when B grows
  # (per-step overhead on single-TC v5e/v6e), capped to bound VMEM.
  bt = 1
  for cand in (8, 4, 2):
    if B % cand == 0 and B // cand >= 2:
      bt = cand
      break
  nb = B // bt

  # Points-per-chunk VMEM budget: activations are (bt*ns, hp) f32 tiles.
  budget = 2048
  if bt * N <= budget:
    ns = N
  else:
    ns = N
    for cand in (1024, 512, 256, 128, 64, 32, 16, 8):
      if N % cand == 0 and bt * cand <= budget:
        ns = cand
        break
    # TODO(synk): pad+mask N for point counts with no multiple-of-8 tile
    # divisor; current fallback is one full-N tile (correct, larger VMEM).
  n_nt = N // ns
  single_pass = (n_nt == 1)

  out_shape = (
      jax.ShapeDtypeStruct((B, N, 3), jnp.float32),
      jax.ShapeDtypeStruct((B, 1, ydim_p), jnp.float32),
  )

  if single_pass:
    kernel = functools.partial(pointnet2_ed_single_pass_kernel,
                               bt=bt, hp=hp, ydim_p=ydim_p)
    grid_spec = pltpu.PrefetchScalarGridSpec(
        num_scalar_prefetch=0,
        grid=(nb,),
        in_specs=[
            pl.BlockSpec((bt, N, 3), lambda b: (b, 0, 0)),          # xyz
            pl.BlockSpec((bt, 1, ydim_p), lambda b: (b, 0, 0)),     # msg
            pl.BlockSpec(wa.shape, lambda b: (0, 0)),               # slab A
            pl.BlockSpec(wb.shape, lambda b: (0, 0)),               # slab B
        ],
        out_specs=(
            pl.BlockSpec((bt, N, 3), lambda b: (b, 0, 0)),          # enc
            pl.BlockSpec((bt, 1, ydim_p), lambda b: (b, 0, 0)),     # dec
        ),
    )
    dims = ("parallel",)
  else:
    kernel = functools.partial(pointnet2_ed_two_pass_kernel,
                               bt=bt, hp=hp, ydim_p=ydim_p)
    grid_spec = pltpu.PrefetchScalarGridSpec(
        num_scalar_prefetch=0,
        grid=(nb, 2, n_nt),
        in_specs=[
            pl.BlockSpec((bt, ns, 3), lambda b, p, n: (b, n, 0)),      # xyz
            pl.BlockSpec((bt, 1, ydim_p), lambda b, p, n: (b, 0, 0)),  # msg
            pl.BlockSpec(wa.shape, lambda b, p, n: (0, 0)),            # slab A
            pl.BlockSpec(wb.shape, lambda b, p, n: (0, 0)),            # slab B
        ],
        out_specs=(
            pl.BlockSpec((bt, ns, 3), lambda b, p, n: (b, n, 0)),      # enc
            pl.BlockSpec((bt, 1, ydim_p), lambda b, p, n: (b, 0, 0)),  # dec
        ),
        scratch_shapes=[
            pltpu.VMEM((bt, hp), jnp.float32),   # running max: encoder pool
            pltpu.VMEM((bt, hp), jnp.float32),   # running max: decoder pool
        ],
    )
    dims = ("parallel", "arbitrary", "arbitrary")

  enc, dec = pl.pallas_call(
      kernel,
      out_shape=out_shape,
      grid_spec=grid_spec,
      compiler_params=pltpu.CompilerParams(dimension_semantics=dims),
  )(xyz, msg3, wa, wb)

  return enc, dec.reshape(B, ydim_p)[:, :ydim]


# --------------------------- pure-JAX reference ------------------------------


def reference_forward(xyz, msg, params):
  """Pure-JAX reference with identical forward semantics (for a smoke check)."""
  (w1, b1, w2, b2, w3x, w3g, w3m, b3, w4, b4,
   v1, c1, v2, c2, v3, c3, v4, c4) = params
  relu = jax.nn.relu
  h1 = relu(jnp.einsum('bnc,ch->bnh', xyz, w1) + b1)
  h2 = relu(jnp.einsum('bnh,hk->bnk', h1, w2) + b2)
  g = h2.max(axis=1)                                   # (B, H)
  fused = g @ w3g + msg @ w3m + b3                     # (B, H)
  h3 = relu(jnp.einsum('bnc,ch->bnh', xyz, w3x) + fused[:, None, :])
  enc = xyz + jnp.einsum('bnh,hc->bnc', h3, w4) + b4
  d1 = relu(jnp.einsum('bnc,ch->bnh', enc, v1) + c1)
  d2 = relu(jnp.einsum('bnh,hk->bnk', d1, v2) + c2)
  gd = d2.max(axis=1)
  d3 = relu(gd @ v3 + c3)
  dec = d3 @ v4 + c4
  return enc, dec


if __name__ == "__main__":
  B, N, F, YDIM, HIDDEN = 2, 16, 24, 8, 32

  key = jax.random.PRNGKey(0)
  k_xyz, k_msg, k_faces, k_idx, k_params = jax.random.split(key, 5)

  xyz = jax.random.normal(k_xyz, (B, N, 3), dtype=jnp.float32)
  msg = (jax.random.uniform(k_msg, (B, YDIM)) > 0.5).astype(jnp.float32)
  faces = jax.random.randint(k_faces, (B, F, 3), 0, N, dtype=jnp.int32)
  idx = jax.random.randint(k_idx, (B, N), 0, N, dtype=jnp.int32)

  params = init_params(k_params, YDIM, HIDDEN)

  encoded_xyz, decoded_msg = pointnet2_ed(xyz, faces, msg, idx, *params)
  jax.block_until_ready((encoded_xyz, decoded_msg))

  assert encoded_xyz.shape == (B, N, 3), encoded_xyz.shape
  assert decoded_msg.shape == (B, YDIM), decoded_msg.shape

  # Loose-tolerance smoke check against a pure-JAX reference (tolerance covers
  # possible reduced-precision matmul passes on either side).
  enc_ref_np, dec_ref_np = reference_forward(xyz, msg, params)
  assert jnp.allclose(encoded_xyz, enc_ref_np, atol=2e-2, rtol=2e-2)
  assert jnp.allclose(decoded_msg, dec_ref_np, atol=2e-2, rtol=2e-2)

  print("KERNEL_OK")
</pallas_src>

<mosaic_0001>
module attributes {stable_mosaic.version = 11 : i64} {
  func.func @pointnet2_ed_single_pass_kernel(%arg0: i32, %arg1: memref<1x16x3xf32, #tpu.memory_space<vmem>>, %arg2: memref<1x1x8xf32, #tpu.memory_space<vmem>>, %arg3: memref<552x128xf32, #tpu.memory_space<vmem>>, %arg4: memref<264x128xf32, #tpu.memory_space<vmem>>, %arg5: memref<1x16x3xf32, #tpu.memory_space<vmem>>, %arg6: memref<1x1x8xf32, #tpu.memory_space<vmem>>) attributes {dimension_semantics = [#tpu.dimension_semantics<parallel>], iteration_bounds = array<i64: 2>, scalar_prefetch = 0 : i64, scratch_operands = 0 : i64, tpu.core_type = #tpu.core_type<tc>, window_params = [{transform_indices = @transform_0, window_bounds = array<i64: 1, 16, 3>}, {transform_indices = @transform_1, window_bounds = array<i64: 1, 1, 8>}, {pipeline_mode = #tpu.pipeline_mode<synchronous>, transform_indices = @transform_2, window_bounds = array<i64: 552, 128>}, {pipeline_mode = #tpu.pipeline_mode<synchronous>, transform_indices = @transform_3, window_bounds = array<i64: 264, 128>}, {transform_indices = @transform_4, window_bounds = array<i64: 1, 16, 3>}, {transform_indices = @transform_5, window_bounds = array<i64: 1, 1, 8>}]} {
    %c544 = arith.constant 544 : index
    %c0 = arith.constant 0 : index
    %0 = vector.load %arg3[%c544, %c0] : memref<552x128xf32, #tpu.memory_space<vmem>>, vector<8x128xf32>
    %1 = vector.extract_strided_slice %0 {offsets = [0, 0], sizes = [1, 128], strides = [1, 1]} : vector<8x128xf32> to vector<1x128xf32>
    %2 = vector.extract_strided_slice %0 {offsets = [1, 0], sizes = [1, 128], strides = [1, 1]} : vector<8x128xf32> to vector<1x128xf32>
    %3 = vector.extract_strided_slice %0 {offsets = [2, 0], sizes = [1, 128], strides = [1, 1]} : vector<8x128xf32> to vector<1x128xf32>
    %4 = vector.extract_strided_slice %0 {offsets = [3, 0], sizes = [1, 128], strides = [1, 1]} : vector<8x128xf32> to vector<1x128xf32>
    %5 = vector.extract_strided_slice %0 {offsets = [4, 0], sizes = [1, 128], strides = [1, 1]} : vector<8x128xf32> to vector<1x128xf32>
    %6 = vector.extract_strided_slice %0 {offsets = [5, 0], sizes = [1, 128], strides = [1, 1]} : vector<8x128xf32> to vector<1x128xf32>
    %c0_0 = arith.constant 0 : index
    %c0_1 = arith.constant 0 : index
    %7 = vector.load %arg3[%c0_0, %c0_1] : memref<552x128xf32, #tpu.memory_space<vmem>>, vector<8x128xf32>
    %8 = vector.extract_strided_slice %7 {offsets = [0, 0], sizes = [3, 128], strides = [1, 1]} : vector<8x128xf32> to vector<3x128xf32>
    %c8 = arith.constant 8 : index
    %c0_2 = arith.constant 0 : index
    %9 = vector.load %arg3[%c8, %c0_2] : memref<552x128xf32, #tpu.memory_space<vmem>>, vector<128x128xf32>
    %c136 = arith.constant 136 : index
    %c0_3 = arith.constant 0 : index
    %10 = vector.load %arg3[%c136, %c0_3] : memref<552x128xf32, #tpu.memory_space<vmem>>, vector<8x128xf32>
    %11 = vector.extract_strided_slice %10 {offsets = [0, 0], sizes = [3, 128], strides = [1, 1]} : vector<8x128xf32> to vector<3x128xf32>
    %c144 = arith.constant 144 : index
    %c0_4 = arith.constant 0 : index
    %12 = vector.load %arg3[%c144, %c0_4] : memref<552x128xf32, #tpu.memory_space<vmem>>, vector<128x128xf32>
    %c272 = arith.constant 272 : index
    %c0_5 = arith.constant 0 : index
    %13 = vector.load %arg3[%c272, %c0_5] : memref<552x128xf32, #tpu.memory_space<vmem>>, vector<8x128xf32>
    %c280 = arith.constant 280 : index
    %c0_6 = arith.constant 0 : index
    %14 = vector.load %arg3[%c280, %c0_6] : memref<552x128xf32, #tpu.memory_space<vmem>>, vector<8x128xf32>
    %15 = vector.extract_strided_slice %14 {offsets = [0, 0], sizes = [3, 128], strides = [1, 1]} : vector<8x128xf32> to vector<3x128xf32>
    %c288 = arith.constant 288 : index
    %c0_7 = arith.constant 0 : index
    %16 = vector.load %arg3[%c288, %c0_7] : memref<552x128xf32, #tpu.memory_space<vmem>>, vector<128x128xf32>
    %c416 = arith.constant 416 : index
    %c0_8 = arith.constant 0 : index
    %17 = vector.load %arg3[%c416, %c0_8] : memref<552x128xf32, #tpu.memory_space<vmem>>, vector<128x128xf32>
    %c0_9 = arith.constant 0 : index
    %c0_10 = arith.constant 0 : index
    %18 = vector.load %arg4[%c0_9, %c0_10] : memref<264x128xf32, #tpu.memory_space<vmem>>, vector<128x128xf32>
    %c128 = arith.constant 128 : index
    %c0_11 = arith.constant 0 : index
    %19 = vector.load %arg4[%c128, %c0_11] : memref<264x128xf32, #tpu.memory_space<vmem>>, vector<128x128xf32>
    %c256 = arith.constant 256 : index
    %c0_12 = arith.constant 0 : index
    %20 = vector.load %arg4[%c256, %c0_12] : memref<264x128xf32, #tpu.memory_space<vmem>>, vector<8x128xf32>
    %21 = vector.extract_strided_slice %20 {offsets = [0, 0], sizes = [1, 128], strides = [1, 1]} : vector<8x128xf32> to vector<1x128xf32>
    %22 = vector.extract_strided_slice %20 {offsets = [1, 0], sizes = [1, 128], strides = [1, 1]} : vector<8x128xf32> to vector<1x128xf32>
    %c0_13 = arith.constant 0 : index
    %c0_14 = arith.constant 0 : index
    %c0_15 = arith.constant 0 : index
    %23 = vector.load %arg1[%c0_13, %c0_14, %c0_15] : memref<1x16x3xf32, #tpu.memory_space<vmem>>, vector<1x16x3xf32>
    %24 = vector.shape_cast %23 : vector<1x16x3xf32> to vector<16x3xf32>
    %c0_16 = arith.constant 0 : index
    %c0_17 = arith.constant 0 : index
    %c0_18 = arith.constant 0 : index
    %25 = vector.load %arg2[%c0_16, %c0_17, %c0_18] : memref<1x1x8xf32, #tpu.memory_space<vmem>>, vector<1x1x8xf32>
    %26 = vector.shape_cast %25 : vector<1x1x8xf32> to vector<1x8xf32>
    %cst = arith.constant dense<0.000000e+00> : vector<16x128xf32>
    %27 = tpu.matmul %24, %8, %cst {dimension_numbers = #tpu.dot_dimension_numbers<[1], [0], [0], [1], [0, 0, 1, 1], [], []>} : vector<16x3xf32>, vector<3x128xf32>, vector<16x128xf32> -> vector<16x128xf32>
    %28 = vector.broadcast %1 : vector<1x128xf32> to vector<16x128xf32>
    %29 = arith.addf %27, %28 : vector<16x128xf32>
    %cst_19 = arith.constant 0.000000e+00 : f32
    %30 = vector.broadcast %cst_19 : f32 to vector<16x128xf32>
    %31 = arith.maximumf %29, %30 : vector<16x128xf32>
    %cst_20 = arith.constant dense<0.000000e+00> : vector<16x128xf32>
    %32 = tpu.matmul %31, %9, %cst_20 {dimension_numbers = #tpu.dot_dimension_numbers<[1], [0], [0], [1], [0, 0, 1, 1], [], []>} : vector<16x128xf32>, vector<128x128xf32>, vector<16x128xf32> -> vector<16x128xf32>
    %33 = vector.broadcast %2 : vector<1x128xf32> to vector<16x128xf32>
    %34 = arith.addf %32, %33 : vector<16x128xf32>
    %cst_21 = arith.constant 0.000000e+00 : f32
    %35 = vector.broadcast %cst_21 : f32 to vector<16x128xf32>
    %36 = arith.maximumf %34, %35 : vector<16x128xf32>
    %cst_22 = arith.constant dense<0xFF800000> : vector<128xf32>
    %37 = vector.multi_reduction <maximumf>, %36, %cst_22 [0] : vector<16x128xf32> to vector<128xf32>
    %38 = vector.shape_cast %37 : vector<128xf32> to vector<1x128xf32>
    %cst_23 = arith.constant dense<0.000000e+00> : vector<1x128xf32>
    %39 = tpu.matmul %38, %12, %cst_23 {dimension_numbers = #tpu.dot_dimension_numbers<[1], [0], [0], [1], [0, 0, 1, 1], [], []>} : vector<1x128xf32>, vector<128x128xf32>, vector<1x128xf32> -> vector<1x128xf32>
    %cst_24 = arith.constant dense<0.000000e+00> : vector<1x128xf32>
    %40 = tpu.matmul %26, %13, %cst_24 {dimension_numbers = #tpu.dot_dimension_numbers<[1], [0], [0], [1], [0, 0, 1, 1], [], []>} : vector<1x8xf32>, vector<8x128xf32>, vector<1x128xf32> -> vector<1x128xf32>
    %41 = arith.addf %39, %40 : vector<1x128xf32>
    %42 = arith.addf %41, %3 : vector<1x128xf32>
    %cst_25 = arith.constant dense<0.000000e+00> : vector<16x128xf32>
    %43 = tpu.matmul %24, %11, %cst_25 {dimension_numbers = #tpu.dot_dimension_numbers<[1], [0], [0], [1], [0, 0, 1, 1], [], []>} : vector<16x3xf32>, vector<3x128xf32>, vector<16x128xf32> -> vector<16x128xf32>
    %44 = vector.broadcast %42 : vector<1x128xf32> to vector<16x128xf32>
    %45 = arith.addf %43, %44 : vector<16x128xf32>
    %cst_26 = arith.constant 0.000000e+00 : f32
    %46 = vector.broadcast %cst_26 : f32 to vector<16x128xf32>
    %47 = arith.maximumf %45, %46 : vector<16x128xf32>
    %cst_27 = arith.constant dense<0.000000e+00> : vector<16x128xf32>
    %48 = tpu.matmul %47, %18, %cst_27 {dimension_numbers = #tpu.dot_dimension_numbers<[1], [0], [0], [1], [0, 0, 1, 1], [], []>} : vector<16x128xf32>, vector<128x128xf32>, vector<16x128xf32> -> vector<16x128xf32>
    %49 = vector.broadcast %21 : vector<1x128xf32> to vector<16x128xf32>
    %50 = arith.addf %48, %49 : vector<16x128xf32>
    %51 = vector.extract_strided_slice %50 {offsets = [0, 0], sizes = [16, 3], strides = [1, 1]} : vector<16x128xf32> to vector<16x3xf32>
    %52 = arith.addf %24, %51 : vector<16x3xf32>
    %c0_28 = arith.constant 0 : index
    %c0_29 = arith.constant 0 : index
    %c0_30 = arith.constant 0 : index
    %53 = vector.load %arg5[%c0_28, %c0_29, %c0_30] : memref<1x16x3xf32, #tpu.memory_space<vmem>>, vector<1x16x3xf32>
    %54 = vector.shape_cast %53 : vector<1x16x3xf32> to vector<16x3xf32>
    %55 = vector.shape_cast %52 : vector<16x3xf32> to vector<1x16x3xf32>
    tpu.vector_store %arg5[%c0_28, %c0_29, %c0_30], %55 {strides = array<i32>} : memref<1x16x3xf32, #tpu.memory_space<vmem>>, vector<1x16x3xf32>,
    %cst_31 = arith.constant dense<0.000000e+00> : vector<16x128xf32>
    %56 = tpu.matmul %52, %15, %cst_31 {dimension_numbers = #tpu.dot_dimension_numbers<[1], [0], [0], [1], [0, 0, 1, 1], [], []>} : vector<16x3xf32>, vector<3x128xf32>, vector<16x128xf32> -> vector<16x128xf32>
    %57 = vector.broadcast %4 : vector<1x128xf32> to vector<16x128xf32>
    %58 = arith.addf %56, %57 : vector<16x128xf32>
    %cst_32 = arith.constant 0.000000e+00 : f32
    %59 = vector.broadcast %cst_32 : f32 to vector<16x128xf32>
    %60 = arith.maximumf %58, %59 : vector<16x128xf32>
    %cst_33 = arith.constant dense<0.000000e+00> : vector<16x128xf32>
    %61 = tpu.matmul %60, %16, %cst_33 {dimension_numbers = #tpu.dot_dimension_numbers<[1], [0], [0], [1], [0, 0, 1, 1], [], []>} : vector<16x128xf32>, vector<128x128xf32>, vector<16x128xf32> -> vector<16x128xf32>
    %62 = vector.broadcast %5 : vector<1x128xf32> to vector<16x128xf32>
    %63 = arith.addf %61, %62 : vector<16x128xf32>
    %cst_34 = arith.constant 0.000000e+00 : f32
    %64 = vector.broadcast %cst_34 : f32 to vector<16x128xf32>
    %65 = arith.maximumf %63, %64 : vector<16x128xf32>
    %cst_35 = arith.constant dense<0xFF800000> : vector<128xf32>
    %66 = vector.multi_reduction <maximumf>, %65, %cst_35 [0] : vector<16x128xf32> to vector<128xf32>
    %67 = vector.shape_cast %66 : vector<128xf32> to vector<1x128xf32>
    %cst_36 = arith.constant dense<0.000000e+00> : vector<1x128xf32>
    %68 = tpu.matmul %67, %17, %cst_36 {dimension_numbers = #tpu.dot_dimension_numbers<[1], [0], [0], [1], [0, 0, 1, 1], [], []>} : vector<1x128xf32>, vector<128x128xf32>, vector<1x128xf32> -> vector<1x128xf32>
    %69 = arith.addf %68, %6 : vector<1x128xf32>
    %cst_37 = arith.constant 0.000000e+00 : f32
    %70 = vector.broadcast %cst_37 : f32 to vector<1x128xf32>
    %71 = arith.maximumf %69, %70 : vector<1x128xf32>
    %cst_38 = arith.constant dense<0.000000e+00> : vector<1x128xf32>
    %72 = tpu.matmul %71, %19, %cst_38 {dimension_numbers = #tpu.dot_dimension_numbers<[1], [0], [0], [1], [0, 0, 1, 1], [], []>} : vector<1x128xf32>, vector<128x128xf32>, vector<1x128xf32> -> vector<1x128xf32>
    %73 = arith.addf %72, %22 : vector<1x128xf32>
    %74 = vector.extract_strided_slice %73 {offsets = [0, 0], sizes = [1, 8], strides = [1, 1]} : vector<1x128xf32> to vector<1x8xf32>
    %c0_39 = arith.constant 0 : index
    %c0_40 = arith.constant 0 : index
    %c0_41 = arith.constant 0 : index
    %75 = vector.load %arg6[%c0_39, %c0_40, %c0_41] : memref<1x1x8xf32, #tpu.memory_space<vmem>>, vector<1x1x8xf32>
    %76 = vector.shape_cast %75 : vector<1x1x8xf32> to vector<1x8xf32>
    %77 = vector.shape_cast %74 : vector<1x8xf32> to vector<1x1x8xf32>
    tpu.vector_store %arg6[%c0_39, %c0_40, %c0_41], %77 {strides = array<i32>} : memref<1x1x8xf32, #tpu.memory_space<vmem>>, vector<1x1x8xf32>,
    return
  }
  func.func @transform_0(%arg0: i32) -> (i32, i32, i32) {
    %c0_i32 = arith.constant 0 : i32
    %c0_i32_0 = arith.constant 0 : i32
    %c0_i32_1 = arith.constant 0 : i32
    return %arg0, %c0_i32, %c0_i32_0 : i32, i32, i32
  }
  func.func @transform_1(%arg0: i32) -> (i32, i32, i32) {
    %c0_i32 = arith.constant 0 : i32
    %c0_i32_0 = arith.constant 0 : i32
    %c0_i32_1 = arith.constant 0 : i32
    return %arg0, %c0_i32, %c0_i32_0 : i32, i32, i32
  }
  func.func @transform_2(%arg0: i32) -> (i32, i32) {
    %c0_i32 = arith.constant 0 : i32
    %c0_i32_0 = arith.constant 0 : i32
    %c0_i32_1 = arith.constant 0 : i32
    return %c0_i32, %c0_i32_0 : i32, i32
  }
  func.func @transform_3(%arg0: i32) -> (i32, i32) {
    %c0_i32 = arith.constant 0 : i32
    %c0_i32_0 = arith.constant 0 : i32
    %c0_i32_1 = arith.constant 0 : i32
    return %c0_i32, %c0_i32_0 : i32, i32
  }
  func.func @transform_4(%arg0: i32) -> (i32, i32, i32) {
    %c0_i32 = arith.constant 0 : i32
    %c0_i32_0 = arith.constant 0 : i32
    %c0_i32_1 = arith.constant 0 : i32
    return %arg0, %c0_i32, %c0_i32_0 : i32, i32, i32
  }
  func.func @transform_5(%arg0: i32) -> (i32, i32, i32) {
    %c0_i32 = arith.constant 0 : i32
    %c0_i32_0 = arith.constant 0 : i32
    %c0_i32_1 = arith.constant 0 : i32
    return %arg0, %c0_i32, %c0_i32_0 : i32, i32, i32
  }
}

</mosaic_0001>

<llo_original>
// kernel: pointnet2_ed.1
$region0: #{pointnet2_ed.1}
  #allocation0 [shape = 'u32[]', space=smem, size = 0x4, offset = 0x4, fixed_abs, tag = 'smem constant byte address 0x4 - core index']
  #allocation1 [shape = 'u32[144,128]{1,0:T(1,128)}', space=vmem, size = 0x12000, scoped, tag = 'internal scratch']
  %s0 = inlined_call_operand.vmem [shape: f32[2,16,3], index: 0, kind: input, shape index: {}]
  %s1 = inlined_call_operand.vmem [shape: f32[2,1,8], index: 1, kind: input, shape index: {}]
  %s2 = inlined_call_operand.vmem [shape: f32[552,128], index: 2, kind: input, shape index: {}]
  %s3 = inlined_call_operand.vmem [shape: f32[264,128], index: 3, kind: input, shape index: {}]
  %s4 = inlined_call_operand.vmem [shape: f32[2,16,3], index: 4, kind: output, shape index: {0}]
  %s5 = inlined_call_operand.hbm [shape: f32[2,1,8], index: 5, kind: output, shape index: {1}]
  %6 = xla_tuple %s4, %s5
  %s7 = sld [smem:[#allocation0]]
  $region57: #{pointnet2_ed.1} parent=0
    _
  %s9 = ssub.s32 1, %s7
  %s10 = scalar_select 0, %s9, %s7
  $region1: #{pointnet2_ed.1} parent=0
    #allocation2 [shape = 'u8[1024]{0}', space=vmem, size = 0x400, scoped, tag = 'output window, operand 1']
    #allocation3 [shape = 's32[2]{0}', space=sflag, size = 0x8, scoped, tag = 'scoped memory for pointnet2_ed.1']
    %11 = vsyncpa [#allocation3], 0
    %s12 = scalar_lea.sflag [#allocation3], 1
    %13 = vsyncpa %s12, 0
    loop: start=0, step=1, limit=4
    $region2: #{pointnet2_ed.1} parent=1 // loop_pre_header
      _
    $region3: #{pointnet2_ed.1} parent=1 // loop_header
      %s15 = sphi 0, %s19
      %p16 = scmp.ge.s32.totalorder %s15, 4
      %s25 = sphi 0, %s27
      %s28 = sphi 0, %s25
      %s29 = sphi 0, %s28
      %s45 = sphi 0, %s29
      %s51 = sphi 0, %s53
      %s54 = sphi 0, %s51
      %s55 = sphi 0, %s54
      %s71 = sphi 0, %s55
      %s75 = sphi 0, %s75
      %s77 = sphi 0, %s75
      %s78 = sphi 0, %s77
      %s92 = sphi 0, %s78
      %s96 = sphi 0, %s96
      %s98 = sphi 0, %s96
      %s99 = sphi 0, %s98
      %s113 = sphi 0, %s99
      %s119 = sphi 0, %s121
      %s122 = sphi 0, %s119
      %s123 = sphi 0, %s122
      %s139 = sphi 0, %s123
      %s145 = sphi 0, %s147
      %s148 = sphi 0, %s145
      %s149 = sphi 0, %s148
      %s165 = sphi 0, %s149
    $region4: #{pointnet2_ed.1} parent=1 // loop_header_branch
      %18 = sbr.rel (%p16) target = $region8
    $region5: #{pointnet2_ed.1} parent=1 // loop_body
      %s20 = ssub.s32 %s15, 1
      %s21 = ssub.s32 %s15, 2
      %s22 = sadd.s32 %s15, 1
      %s23 = ssub.s32 %s15, %s22
      %p24 = scmp.eq.s32.totalorder %s23, 0
      %s26 = sadd.s32 %s25, 1
      %s27 = scalar_select %p24, %s25, %s26
      %p30 = pneg %p24
      %p31 = scmp.eq.s32.totalorder %s15, 1
      %p32 = por %p30, %p31
      %p33 = scmp.ne.s32.totalorder %s25, %s28
      %p34 = scmp.eq.s32.totalorder %s15, 0
      %p35 = por %p33, %p34
      %p36 = scmp.ne.s32.totalorder %s25, %s28
      %p37 = scmp.eq.s32.totalorder %s20, 1
      %p38 = por %p36, %p37
      %p39 = scmp.ne.s32.totalorder %s28, %s29
      %p40 = scmp.eq.s32.totalorder %s20, 0
      %p41 = por %p39, %p40
      %p42 = scmp.ne.s32.totalorder %s28, %s29
      %p43 = scmp.eq.s32.totalorder %s21, 1
      %p44 = por %p42, %p43
      %p46 = scmp.ne.s32.totalorder %s29, %s45
      %p47 = scmp.eq.s32.totalorder %s21, 0
      %p48 = por %p46, %p47
      %s49 = ssub.s32 %s15, %s22
      %p50 = scmp.eq.s32.totalorder %s49, 0
      %s52 = sadd.s32 %s51, 1
      %s53 = scalar_select %p50, %s51, %s52
      %p56 = pneg %p50
      %p57 = scmp.eq.s32.totalorder %s15, 1
      %p58 = por %p56, %p57
      %p59 = scmp.ne.s32.totalorder %s51, %s54
      %p60 = scmp.eq.s32.totalorder %s15, 0
      %p61 = por %p59, %p60
      %p62 = scmp.ne.s32.totalorder %s51, %s54
      %p63 = scmp.eq.s32.totalorder %s20, 1
      %p64 = por %p62, %p63
      %p65 = scmp.ne.s32.totalorder %s54, %s55
      %p66 = scmp.eq.s32.totalorder %s20, 0
      %p67 = por %p65, %p66
      %p68 = scmp.ne.s32.totalorder %s54, %s55
      %p69 = scmp.eq.s32.totalorder %s21, 1
      %p70 = por %p68, %p69
      %p72 = scmp.ne.s32.totalorder %s55, %s71
      %p73 = scmp.eq.s32.totalorder %s21, 0
      %p74 = por %p72, %p73
      %s76 = sadd.s32 %s75, 1
      %p79 = scmp.eq.s32.totalorder %s15, 1
      %p80 = scmp.ne.s32.totalorder %s75, %s77
      %p81 = scmp.eq.s32.totalorder %s15, 0
      %p82 = por %p80, %p81
      %p83 = scmp.ne.s32.totalorder %s75, %s77
      %p84 = scmp.eq.s32.totalorder %s20, 1
      %p85 = por %p83, %p84
      %p86 = scmp.ne.s32.totalorder %s77, %s78
      %p87 = scmp.eq.s32.totalorder %s20, 0
      %p88 = por %p86, %p87
      %p89 = scmp.ne.s32.totalorder %s77, %s78
      %p90 = scmp.eq.s32.totalorder %s21, 1
      %p91 = por %p89, %p90
      %p93 = scmp.ne.s32.totalorder %s78, %s92
      %p94 = scmp.eq.s32.totalorder %s21, 0
      %p95 = por %p93, %p94
      %s97 = sadd.s32 %s96, 1
      %p100 = scmp.eq.s32.totalorder %s15, 1
      %p101 = scmp.ne.s32.totalorder %s96, %s98
      %p102 = scmp.eq.s32.totalorder %s15, 0
      %p103 = por %p101, %p102
      %p104 = scmp.ne.s32.totalorder %s96, %s98
      %p105 = scmp.eq.s32.totalorder %s20, 1
      %p106 = por %p104, %p105
      %p107 = scmp.ne.s32.totalorder %s98, %s99
      %p108 = scmp.eq.s32.totalorder %s20, 0
      %p109 = por %p107, %p108
      %p110 = scmp.ne.s32.totalorder %s98, %s99
      %p111 = scmp.eq.s32.totalorder %s21, 1
      %p112 = por %p110, %p111
      %p114 = scmp.ne.s32.totalorder %s99, %s113
      %p115 = scmp.eq.s32.totalorder %s21, 0
      %p116 = por %p114, %p115
      %s117 = ssub.s32 %s15, %s22
      %p118 = scmp.eq.s32.totalorder %s117, 0
      %s120 = sadd.s32 %s119, 1
      %s121 = scalar_select %p118, %s119, %s120
      %p124 = pneg %p118
      %p125 = scmp.eq.s32.totalorder %s15, 1
      %p126 = por %p124, %p125
      %p127 = scmp.ne.s32.totalorder %s119, %s122
      %p128 = scmp.eq.s32.totalorder %s15, 0
      %p129 = por %p127, %p128
      %p130 = scmp.ne.s32.totalorder %s119, %s122
      %p131 = scmp.eq.s32.totalorder %s20, 1
      %p132 = por %p130, %p131
      %p133 = scmp.ne.s32.totalorder %s122, %s123
      %p134 = scmp.eq.s32.totalorder %s20, 0
      %p135 = por %p133, %p134
      %p136 = scmp.ne.s32.totalorder %s122, %s123
      %p137 = scmp.eq.s32.totalorder %s21, 1
      %p138 = por %p136, %p137
      %p140 = scmp.ne.s32.totalorder %s123, %s139
      %p141 = scmp.eq.s32.totalorder %s21, 0
      %p142 = por %p140, %p141
      %s143 = ssub.s32 %s15, %s22
      %p144 = scmp.eq.s32.totalorder %s143, 0
      %s146 = sadd.s32 %s145, 1
      %s147 = scalar_select %p144, %s145, %s146
      %p150 = pneg %p144
      %p151 = scmp.eq.s32.totalorder %s15, 1
      %p152 = por %p150, %p151
      %p153 = scmp.ne.s32.totalorder %s145, %s148
      %p154 = scmp.eq.s32.totalorder %s15, 0
      %p155 = por %p153, %p154
      %p156 = scmp.ne.s32.totalorder %s145, %s148
      %p157 = scmp.eq.s32.totalorder %s20, 1
      %p158 = por %p156, %p157
      %p159 = scmp.ne.s32.totalorder %s148, %s149
      %p160 = scmp.eq.s32.totalorder %s20, 0
      %p161 = por %p159, %p160
      %p162 = scmp.ne.s32.totalorder %s148, %s149
      %p163 = scmp.eq.s32.totalorder %s21, 1
      %p164 = por %p162, %p163
      %p166 = scmp.ne.s32.totalorder %s149, %s165
      %p167 = scmp.eq.s32.totalorder %s21, 0
      %p168 = por %p166, %p167
      %p169 = scmp.le.s32.totalorder 1, %s15
      %p170 = scmp.lt.s32.totalorder %s15, 3
      %p171 = pnand %p169, %p170
      %p172 = pneg %p171
      // Predicated region
      $region9: #{pointnet2_ed.1} parent=5 // pred_check
        _
      $region10: #{pointnet2_ed.1} parent=5 // pred_check_branch
        %174 = sbr.rel (%p171) target = $region12
      $region11: #{pointnet2_ed.1} parent=5 // pred_region
        %s175 = ssub.s32 %s15, 1
        // Predicated region
        $region13: #{pointnet2_ed.1} parent=11 // pred_check
          %p176 = pneg %p88
        $region14: #{pointnet2_ed.1} parent=11 // pred_check_branch
          %178 = sbr.rel (%p176) target = $region16
        $region15: #{pointnet2_ed.1} parent=11 // pred_region
          _
        $region16: #{pointnet2_ed.1} parent=11 // pred_fallthru
          _
        // Predicated region
        $region17: #{pointnet2_ed.1} parent=11 // pred_check
          %p179 = pneg %p109
        $region18: #{pointnet2_ed.1} parent=11 // pred_check_branch
          %181 = sbr.rel (%p179) target = $region20
        $region19: #{pointnet2_ed.1} parent=11 // pred_region
          _
        $region20: #{pointnet2_ed.1} parent=11 // pred_fallthru
          _
      $region12: #{pointnet2_ed.1} parent=5 // pred_fallthru
        _
      %p182 = scmp.lt.s32.totalorder %s15, 2
      // Predicated region
      $region21: #{pointnet2_ed.1} parent=5 // pred_check
        %p183 = pneg %p182
      $region22: #{pointnet2_ed.1} parent=5 // pred_check_branch
        %185 = sbr.rel (%p183) target = $region24
      $region23: #{pointnet2_ed.1} parent=5 // pred_region
        // Predicated region
        $region25: #{pointnet2_ed.1} parent=23 // pred_check
          %p186 = pneg %p35
        $region26: #{pointnet2_ed.1} parent=23 // pred_check_branch
          %188 = sbr.rel (%p186) target = $region28
        $region27: #{pointnet2_ed.1} parent=23 // pred_region
          %p189 = scmp.lt.s32.totalorder %s15, 1
          %s190 = scalar_select %p189, %s15, 1
          %s191 = smul.addr %s190, 2
          %s192 = smul.addr %s191, 8
          %s193 = scalar_lea.vmem %s0, %s192
        $region28: #{pointnet2_ed.1} parent=23 // pred_fallthru
          _
        // Predicated region
        $region29: #{pointnet2_ed.1} parent=23 // pred_check
          %p194 = pneg %p61
        $region30: #{pointnet2_ed.1} parent=23 // pred_check_branch
          %196 = sbr.rel (%p194) target = $region32
        $region31: #{pointnet2_ed.1} parent=23 // pred_region
          %p197 = scmp.lt.s32.totalorder %s15, 1
          %s198 = scalar_select %p197, %s15, 1
          %s199 = scalar_lea.vmem %s1, %s198
        $region32: #{pointnet2_ed.1} parent=23 // pred_fallthru
          _
      $region24: #{pointnet2_ed.1} parent=5 // pred_fallthru
        _
      %p200 = scmp.le.s32.totalorder 1, %s15
      %p201 = scmp.lt.s32.totalorder %s15, 3
      %p202 = pnand %p200, %p201
      %p203 = pneg %p202
      // Predicated region
      $region33: #{pointnet2_ed.1} parent=5 // pred_check
        _
      $region34: #{pointnet2_ed.1} parent=5 // pred_check_branch
        %205 = sbr.rel (%p202) target = $region36
      $region35: #{pointnet2_ed.1} parent=5 // pred_region
        %s206 = ssub.s32 %s15, 1
        %p207 = scmp.lt.s32.totalorder %s20, 1
        %s208 = scalar_select %p207, %s20, 1
        %s209 = smul.addr %s208, 2
        %s210 = smul.addr %s209, 8
        %s211 = scalar_lea.vmem %s0, %s210
        %p212 = pneg %p41
        %p213 = pneg %p38
        %p214 = scmp.lt.s32.totalorder %s20, 1
        %s215 = scalar_select %p214, %s20, 1
        %s216 = scalar_lea.vmem %s1, %s215
        %p217 = pneg %p67
        %p218 = pneg %p64
        %p219 = pneg %p88
        %p220 = pneg %p85
        %p221 = pneg %p109
        %p222 = pneg %p106
        %p223 = pneg %p135
        %p224 = pneg %p132
        %p225 = scmp.lt.s32.totalorder %s20, 1
        %s226 = scalar_select %p225, %s20, 1
        %s227 = smul.addr %s226, 2
        %s228 = smul.addr %s227, 8
        %s229 = scalar_lea.vmem %s4, %s228
        %p230 = pneg %p161
        %p231 = pneg %p158
        %s232 = sand.u32 %s148, 1
        %s233 = scalar_lea.sflag [#allocation3], %s232
        %s234 = sand.u32 %s148, 1
        %s235 = scalar_lea.vmem [#allocation2], %s234
        %p236 = scmp.lt.s32.totalorder %s20, 1
        %s237 = scalar_select %p236, %s20, 1
        %s238 = smul.addr %s237, 2
        %s239 = smul.addr %s238, 8
        %s240 = scalar_lea.vmem %s0, %s239
        %p241 = scmp.lt.s32.totalorder %s20, 1
        %s242 = scalar_select %p241, %s20, 1
        %s243 = scalar_lea.vmem %s1, %s242
        %p244 = scmp.lt.s32.totalorder %s20, 1
        %s245 = scalar_select %p244, %s20, 1
        %s246 = smul.addr %s245, 2
        %s247 = smul.addr %s246, 8
        %s248 = scalar_lea.vmem %s4, %s247
        %v249 = vld [vmem:[%s2 + $0x220] sm:$0xff]
        %v250 = vld [vmem:[%s2] sm:$0xff]
        %v251 = vld [vmem:[%s2 + $0x8] sm:$0xff]
        %v252 = vld [vmem:[%s2 + $0x10] sm:$0xff]
        %v253 = vld [vmem:[%s2 + $0x18] sm:$0xff]
        %v254 = vld [vmem:[%s2 + $0x20] sm:$0xff]
        %v255 = vld [vmem:[%s2 + $0x28] sm:$0xff]
        %v256 = vld [vmem:[%s2 + $0x30] sm:$0xff]
        %v257 = vld [vmem:[%s2 + $0x38] sm:$0xff]
        %v258 = vld [vmem:[%s2 + $0x40] sm:$0xff]
        %v259 = vld [vmem:[%s2 + $0x48] sm:$0xff]
        %v260 = vld [vmem:[%s2 + $0x50] sm:$0xff]
        %v261 = vld [vmem:[%s2 + $0x58] sm:$0xff]
        %v262 = vld [vmem:[%s2 + $0x60] sm:$0xff]
        %v263 = vld [vmem:[%s2 + $0x68] sm:$0xff]
        %v264 = vld [vmem:[%s2 + $0x70] sm:$0xff]
        %v265 = vld [vmem:[%s2 + $0x78] sm:$0xff]
        %v266 = vld [vmem:[%s2 + $0x80] sm:$0xff]
        %v267 = vld [vmem:[%s2 + $0x88] sm:$0xff]
        %v268 = vld [vmem:[%s2 + $0x90] sm:$0xff]
        %v269 = vld [vmem:[%s2 + $0x98] sm:$0xff]
        %v270 = vld [vmem:[%s2 + $0xa0] sm:$0xff]
        %v271 = vld [vmem:[%s2 + $0xa8] sm:$0xff]
        %v272 = vld [vmem:[%s2 + $0xb0] sm:$0xff]
        %v273 = vld [vmem:[%s2 + $0xb8] sm:$0xff]
        %v274 = vld [vmem:[%s2 + $0xc0] sm:$0xff]
        %v275 = vld [vmem:[%s2 + $0xc8] sm:$0xff]
        %v276 = vld [vmem:[%s2 + $0xd0] sm:$0xff]
        %v277 = vld [vmem:[%s2 + $0xd8] sm:$0xff]
        %v278 = vld [vmem:[%s2 + $0xe0] sm:$0xff]
        %v279 = vld [vmem:[%s2 + $0xe8] sm:$0xff]
        %v280 = vld [vmem:[%s2 + $0xf0] sm:$0xff]
        %v281 = vld [vmem:[%s2 + $0xf8] sm:$0xff]
        %v282 = vld [vmem:[%s2 + $0x100] sm:$0xff]
        %v283 = vld [vmem:[%s2 + $0x108] sm:$0xff]
        %v284 = vld [vmem:[%s2 + $0x110] sm:$0xff]
        %v285 = vld [vmem:[%s2 + $0x118] sm:$0xff]
        %v286 = vld [vmem:[%s2 + $0x120] sm:$0xff]
        %v287 = vld [vmem:[%s2 + $0x128] sm:$0xff]
        %v288 = vld [vmem:[%s2 + $0x130] sm:$0xff]
        %v289 = vld [vmem:[%s2 + $0x138] sm:$0xff]
        %v290 = vld [vmem:[%s2 + $0x140] sm:$0xff]
        %v291 = vld [vmem:[%s2 + $0x148] sm:$0xff]
        %v292 = vld [vmem:[%s2 + $0x150] sm:$0xff]
        %v293 = vld [vmem:[%s2 + $0x158] sm:$0xff]
        %v294 = vld [vmem:[%s2 + $0x160] sm:$0xff]
        %v295 = vld [vmem:[%s2 + $0x168] sm:$0xff]
        %v296 = vld [vmem:[%s2 + $0x170] sm:$0xff]
        %v297 = vld [vmem:[%s2 + $0x178] sm:$0xff]
        %v298 = vld [vmem:[%s2 + $0x180] sm:$0xff]
        %v299 = vld [vmem:[%s2 + $0x188] sm:$0xff]
        %v300 = vld [vmem:[%s2 + $0x190] sm:$0xff]
        %v301 = vld [vmem:[%s2 + $0x198] sm:$0xff]
        %v302 = vld [vmem:[%s2 + $0x1a0] sm:$0xff]
        %v303 = vld [vmem:[%s2 + $0x1a8] sm:$0xff]
        %v304 = vld [vmem:[%s2 + $0x1b0] sm:$0xff]
        %v305 = vld [vmem:[%s2 + $0x1b8] sm:$0xff]
        %v306 = vld [vmem:[%s2 + $0x1c0] sm:$0xff]
        %v307 = vld [vmem:[%s2 + $0x1c8] sm:$0xff]
        %v308 = vld [vmem:[%s2 + $0x1d0] sm:$0xff]
        %v309 = vld [vmem:[%s2 + $0x1d8] sm:$0xff]
        %v310 = vld [vmem:[%s2 + $0x1e0] sm:$0xff]
        %v311 = vld [vmem:[%s2 + $0x1e8] sm:$0xff]
        %v312 = vld [vmem:[%s2 + $0x1f0] sm:$0xff]
        %v313 = vld [vmem:[%s2 + $0x1f8] sm:$0xff]
        %v314 = vld [vmem:[%s2 + $0x200] sm:$0xff]
        %v315 = vld [vmem:[%s2 + $0x208] sm:$0xff]
        %v316 = vld [vmem:[%s2 + $0x210] sm:$0xff]
        %v317 = vld [vmem:[%s2 + $0x218] sm:$0xff]
        %v318 = vld [vmem:[%s3] sm:$0xff]
        %v319 = vld [vmem:[%s3 + $0x8] sm:$0xff]
        %v320 = vld [vmem:[%s3 + $0x10] sm:$0xff]
        %v321 = vld [vmem:[%s3 + $0x18] sm:$0xff]
        %v322 = vld [vmem:[%s3 + $0x20] sm:$0xff]
        %v323 = vld [vmem:[%s3 + $0x28] sm:$0xff]
        %v324 = vld [vmem:[%s3 + $0x30] sm:$0xff]
        %v325 = vld [vmem:[%s3 + $0x38] sm:$0xff]
        %v326 = vld [vmem:[%s3 + $0x40] sm:$0xff]
        %v327 = vld [vmem:[%s3 + $0x48] sm:$0xff]
        %v328 = vld [vmem:[%s3 + $0x50] sm:$0xff]
        %v329 = vld [vmem:[%s3 + $0x58] sm:$0xff]
        %v330 = vld [vmem:[%s3 + $0x60] sm:$0xff]
        %v331 = vld [vmem:[%s3 + $0x68] sm:$0xff]
        %v332 = vld [vmem:[%s3 + $0x70] sm:$0xff]
        %v333 = vld [vmem:[%s3 + $0x78] sm:$0xff]
        %v334 = vld [vmem:[%s3 + $0x80] sm:$0xff]
        %v335 = vld [vmem:[%s3 + $0x88] sm:$0xff]
        %v336 = vld [vmem:[%s3 + $0x90] sm:$0xff]
        %v337 = vld [vmem:[%s3 + $0x98] sm:$0xff]
        %v338 = vld [vmem:[%s3 + $0xa0] sm:$0xff]
        %v339 = vld [vmem:[%s3 + $0xa8] sm:$0xff]
        %v340 = vld [vmem:[%s3 + $0xb0] sm:$0xff]
        %v341 = vld [vmem:[%s3 + $0xb8] sm:$0xff]
        %v342 = vld [vmem:[%s3 + $0xc0] sm:$0xff]
        %v343 = vld [vmem:[%s3 + $0xc8] sm:$0xff]
        %v344 = vld [vmem:[%s3 + $0xd0] sm:$0xff]
        %v345 = vld [vmem:[%s3 + $0xd8] sm:$0xff]
        %v346 = vld [vmem:[%s3 + $0xe0] sm:$0xff]
        %v347 = vld [vmem:[%s3 + $0xe8] sm:$0xff]
        %v348 = vld [vmem:[%s3 + $0xf0] sm:$0xff]
        %v349 = vld [vmem:[%s3 + $0xf8] sm:$0xff]
        %v350 = vld [vmem:[%s3 + $0x100] sm:$0xff]
        %v351 = vld [vmem:[%s240] sm:$0xff]
        %v352 = vld [vmem:[%s240 + $0x8] sm:$0xff]
        %v353 = vld [vmem:[%s243] sm:$0x1]
        %v354 = vlaneseq
        %v355 = vshrl.u32 %v354, 7
        %v356 = vsub.s32 0, %v355
        %v357 = vrot.slane %v249, %v356
        %vm358 = vcmask 23552
        %v360 = vsel %vm358, %v351, 0
        %v363 = vsel %vm358, %v352, 0
        %vm365 = vcmask 1042432
        %v367 = vsel %vm365, %v250, 0
        %369 = vmatprep.subr.mxu0 0.0
        %370 = vmatpush1.msra.mxu0 0.0
        %371 = vmatprep.subr.mxu0 0.0
        %372 = vmatpush1.msra.mxu0 0.0
        %373 = vmatprep.subr.mxu0 0.0
        %374 = vmatpush1.msra.mxu0 0.0
        %375 = vmatprep.subr.mxu0 0.0
        %376 = vmatpush1.msra.mxu0 0.0
        %377 = vmatprep.subr.mxu0 0.0
        %378 = vmatpush1.msra.mxu0 0.0
        %379 = vmatprep.subr.mxu0 0.0
        %380 = vmatpush1.msra.mxu0 0.0
        %381 = vmatprep.subr.mxu0 0.0
        %382 = vmatpush1.msra.mxu0 0.0
        %383 = vmatprep.subr.mxu0 0.0
        %384 = vmatpush1.msra.mxu0 0.0
        %385 = vmatprep.subr.mxu0 0.0
        %386 = vmatpush1.msra.mxu0 0.0
        %387 = vmatprep.subr.mxu0 0.0
        %388 = vmatpush1.msra.mxu0 0.0
        %389 = vmatprep.subr.mxu0 0.0
        %390 = vmatpush1.msra.mxu0 0.0
        %391 = vmatprep.subr.mxu0 0.0
        %392 = vmatpush1.msra.mxu0 0.0
        %393 = vmatprep.subr.mxu0 0.0
        %394 = vmatpush1.msra.mxu0 0.0
        %395 = vmatprep.subr.mxu0 0.0
        %396 = vmatpush1.msra.mxu0 0.0
        %397 = vmatprep.subr.mxu0 0.0
        %398 = vmatpush1.msra.mxu0 0.0
        %399 = vmatprep.subr.mxu0 0.0
        %400 = vmatpush1.msra.mxu0 %v367
        %401 = vmatprep.subr.mxu0 0.0
        %402 = vmatpush2.msra.mxu0 0.0
        %403 = vmatprep.subr.mxu0 0.0
        %404 = vmatpush2.msra.mxu0 0.0
        %405 = vmatprep.subr.mxu0 0.0
        %406 = vmatpush2.msra.mxu0 0.0
        %407 = vmatprep.subr.mxu0 0.0
        %408 = vmatpush2.msra.mxu0 0.0
        %409 = vmatprep.subr.mxu0 0.0
        %410 = vmatpush2.msra.mxu0 0.0
        %411 = vmatprep.subr.mxu0 0.0
        %412 = vmatpush2.msra.mxu0 0.0
        %413 = vmatprep.subr.mxu0 0.0
        %414 = vmatpush2.msra.mxu0 0.0
        %415 = vmatprep.subr.mxu0 0.0
        %416 = vmatpush2.msra.mxu0 0.0
        %417 = vmatprep.subr.mxu0 0.0
        %418 = vmatpush2.msra.mxu0 0.0
        %419 = vmatprep.subr.mxu0 0.0
        %420 = vmatpush2.msra.mxu0 0.0
        %421 = vmatprep.subr.mxu0 0.0
        %422 = vmatpush2.msra.mxu0 0.0
        %423 = vmatprep.subr.mxu0 0.0
        %424 = vmatpush2.msra.mxu0 0.0
        %425 = vmatprep.subr.mxu0 0.0
        %426 = vmatpush2.msra.mxu0 0.0
        %427 = vmatprep.subr.mxu0 0.0
        %428 = vmatpush2.msra.mxu0 0.0
        %429 = vmatprep.subr.mxu0 0.0
        %430 = vmatpush2.msra.mxu0 0.0
        %431 = vmatprep.subr.mxu0 0.0
        %432 = vmatpush2.msra.mxu0 0.0
        %433 = vmatprep.mubr.f32.mxu0 0.0
        %434 = vmatmul.mubr.f32.gmra.mxu0 %v360
        %v435 = vpop.f32.mrf.mxu0
        %v436 = vadd.f32 %v357, %v435
        %v437 = vpop.f32.mrf.mxu0
        %438 = vmatprep.mubr.f32.mxu0 0.0
        %439 = vmatmul.mubr.f32.gmra.mxu0 %v363
        %v440 = vpop.f32.mrf.mxu0
        %v441 = vadd.f32 %v357, %v440
        %v442 = vpop.f32.mrf.mxu0
        %443 = vdwg.mxu0
        %v444 = vmax.f32 %v436, 0.0
        %v445 = vmax.f32 %v441, 0.0
        %v446 = vlaneseq
        %v447 = vshrl.u32 %v446, 7
        %v448 = vsub.s32 1, %v447
        %v449 = vrot.slane %v249, %v448
        %450 = vmatprep.subr.mxu0 0.0
        %451 = vmatpush1.msra.mxu0 %v266
        %452 = vmatprep.subr.mxu0 0.0
        %453 = vmatpush1.msra.mxu0 %v265
        %454 = vmatprep.subr.mxu0 0.0
        %455 = vmatpush1.msra.mxu0 %v264
        %456 = vmatprep.subr.mxu0 0.0
        %457 = vmatpush1.msra.mxu0 %v263
        %458 = vmatprep.subr.mxu0 0.0
        %459 = vmatpush1.msra.mxu0 %v262
        %460 = vmatprep.subr.mxu0 0.0
        %461 = vmatpush1.msra.mxu0 %v261
        %462 = vmatprep.subr.mxu0 0.0
        %463 = vmatpush1.msra.mxu0 %v260
        %464 = vmatprep.subr.mxu0 0.0
        %465 = vmatpush1.msra.mxu0 %v259
        %466 = vmatprep.subr.mxu0 0.0
        %467 = vmatpush1.msra.mxu0 %v258
        %468 = vmatprep.subr.mxu0 0.0
        %469 = vmatpush1.msra.mxu0 %v257
        %470 = vmatprep.subr.mxu0 0.0
        %471 = vmatpush1.msra.mxu0 %v256
        %472 = vmatprep.subr.mxu0 0.0
        %473 = vmatpush1.msra.mxu0 %v255
        %474 = vmatprep.subr.mxu0 0.0
        %475 = vmatpush1.msra.mxu0 %v254
        %476 = vmatprep.subr.mxu0 0.0
        %477 = vmatpush1.msra.mxu0 %v253
        %478 = vmatprep.subr.mxu0 0.0
        %479 = vmatpush1.msra.mxu0 %v252
        %480 = vmatprep.subr.mxu0 0.0
        %481 = vmatpush1.msra.mxu0 %v251
        %482 = vmatprep.subr.mxu0 0.0
        %483 = vmatpush2.msra.mxu0 0.0
        %484 = vmatprep.subr.mxu0 0.0
        %485 = vmatpush2.msra.mxu0 0.0
        %486 = vmatprep.subr.mxu0 0.0
        %487 = vmatpush2.msra.mxu0 0.0
        %488 = vmatprep.subr.mxu0 0.0
        %489 = vmatpush2.msra.mxu0 0.0
        %490 = vmatprep.subr.mxu0 0.0
        %491 = vmatpush2.msra.mxu0 0.0
        %492 = vmatprep.subr.mxu0 0.0
        %493 = vmatpush2.msra.mxu0 0.0
        %494 = vmatprep.subr.mxu0 0.0
        %495 = vmatpush2.msra.mxu0 0.0
        %496 = vmatprep.subr.mxu0 0.0
        %497 = vmatpush2.msra.mxu0 0.0
        %498 = vmatprep.subr.mxu0 0.0
        %499 = vmatpush2.msra.mxu0 0.0
        %500 = vmatprep.subr.mxu0 0.0
        %501 = vmatpush2.msra.mxu0 0.0
        %502 = vmatprep.subr.mxu0 0.0
        %503 = vmatpush2.msra.mxu0 0.0
        %504 = vmatprep.subr.mxu0 0.0
        %505 = vmatpush2.msra.mxu0 0.0
        %506 = vmatprep.subr.mxu0 0.0
        %507 = vmatpush2.msra.mxu0 0.0
        %508 = vmatprep.subr.mxu0 0.0
        %509 = vmatpush2.msra.mxu0 0.0
        %510 = vmatprep.subr.mxu0 0.0
        %511 = vmatpush2.msra.mxu0 0.0
        %512 = vmatprep.subr.mxu0 0.0
        %513 = vmatpush2.msra.mxu0 0.0
        %514 = vmatprep.mubr.f32.mxu0 0.0
        %515 = vmatmul.mubr.f32.gmra.mxu0 %v444
        %v516 = vpop.f32.mrf.mxu0
        %v517 = vadd.f32 %v449, %v516
        %v518 = vpop.f32.mrf.mxu0
        %519 = vmatprep.mubr.f32.mxu0 0.0
        %520 = vmatmul.mubr.f32.gmra.mxu0 %v445
        %v521 = vpop.f32.mrf.mxu0
        %v522 = vadd.f32 %v449, %v521
        %v523 = vpop.f32.mrf.mxu0
        %524 = vdwg.mxu0
        %v525 = vmax.f32 %v517, 0.0
        %v526 = vmax.f32 %v522, 0.0
        %v527 = vmax.f32 %v525, %v526
        %v528 = vrot.slane %v527, 4
        %v529 = vmax.f32 %v527, %v528
        %v530 = vrot.slane %v529, 2
        %v531 = vmax.f32 %v529, %v530
        %v532 = vrot.slane %v531, 1
        %v533 = vmax.f32 %v531, %v532
        %vm534 = vcmask 64512
        %v536 = vsel %vm534, %v353, 0
        %538 = vmatprep.subr.mxu0 0.0
        %539 = vmatpush1.msra.mxu0 0.0
        %540 = vmatprep.subr.mxu0 0.0
        %541 = vmatpush1.msra.mxu0 0.0
        %542 = vmatprep.subr.mxu0 0.0
        %543 = vmatpush1.msra.mxu0 0.0
        %544 = vmatprep.subr.mxu0 0.0
        %545 = vmatpush1.msra.mxu0 0.0
        %546 = vmatprep.subr.mxu0 0.0
        %547 = vmatpush1.msra.mxu0 0.0
        %548 = vmatprep.subr.mxu0 0.0
        %549 = vmatpush1.msra.mxu0 0.0
        %550 = vmatprep.subr.mxu0 0.0
        %551 = vmatpush1.msra.mxu0 0.0
        %552 = vmatprep.subr.mxu0 0.0
        %553 = vmatpush1.msra.mxu0 0.0
        %554 = vmatprep.subr.mxu0 0.0
        %555 = vmatpush1.msra.mxu0 0.0
        %556 = vmatprep.subr.mxu0 0.0
        %557 = vmatpush1.msra.mxu0 0.0
        %558 = vmatprep.subr.mxu0 0.0
        %559 = vmatpush1.msra.mxu0 0.0
        %560 = vmatprep.subr.mxu0 0.0
        %561 = vmatpush1.msra.mxu0 0.0
        %562 = vmatprep.subr.mxu0 0.0
        %563 = vmatpush1.msra.mxu0 0.0
        %564 = vmatprep.subr.mxu0 0.0
        %565 = vmatpush1.msra.mxu0 0.0
        %566 = vmatprep.subr.mxu0 0.0
        %567 = vmatpush1.msra.mxu0 0.0
        %568 = vmatprep.subr.mxu0 0.0
        %569 = vmatpush1.msra.mxu0 %v284
        %570 = vmatprep.subr.mxu0 0.0
        %571 = vmatpush2.msra.mxu0 0.0
        %572 = vmatprep.subr.mxu0 0.0
        %573 = vmatpush2.msra.mxu0 0.0
        %574 = vmatprep.subr.mxu0 0.0
        %575 = vmatpush2.msra.mxu0 0.0
        %576 = vmatprep.subr.mxu0 0.0
        %577 = vmatpush2.msra.mxu0 0.0
        %578 = vmatprep.subr.mxu0 0.0
        %579 = vmatpush2.msra.mxu0 0.0
        %580 = vmatprep.subr.mxu0 0.0
        %581 = vmatpush2.msra.mxu0 0.0
        %582 = vmatprep.subr.mxu0 0.0
        %583 = vmatpush2.msra.mxu0 0.0
        %584 = vmatprep.subr.mxu0 0.0
        %585 = vmatpush2.msra.mxu0 0.0
        %586 = vmatprep.subr.mxu0 0.0
        %587 = vmatpush2.msra.mxu0 0.0
        %588 = vmatprep.subr.mxu0 0.0
        %589 = vmatpush2.msra.mxu0 0.0
        %590 = vmatprep.subr.mxu0 0.0
        %591 = vmatpush2.msra.mxu0 0.0
        %592 = vmatprep.subr.mxu0 0.0
        %593 = vmatpush2.msra.mxu0 0.0
        %594 = vmatprep.subr.mxu0 0.0
        %595 = vmatpush2.msra.mxu0 0.0
        %596 = vmatprep.subr.mxu0 0.0
        %597 = vmatpush2.msra.mxu0 0.0
        %598 = vmatprep.subr.mxu0 0.0
        %599 = vmatpush2.msra.mxu0 0.0
        %600 = vmatprep.subr.mxu0 0.0
        %601 = vmatpush2.msra.mxu0 0.0
        %602 = vmatprep.mubr.f32.mxu0 0.0
        %603 = vmatmul.mubr.f32.gmra.mxu0 %v536
        %v604 = vpop.f32.mrf.mxu0
        %v605 = vadd.f32 0.0, %v604
        %v606 = vpop.f32.mrf.mxu0
        %607 = vdwg.mxu0
        %608 = vmatprep.subr.mxu0 0.0
        %609 = vmatpush1.msra.mxu0 %v283
        %610 = vmatprep.subr.mxu0 0.0
        %611 = vmatpush1.msra.mxu0 %v282
        %612 = vmatprep.subr.mxu0 0.0
        %613 = vmatpush1.msra.mxu0 %v281
        %614 = vmatprep.subr.mxu0 0.0
        %615 = vmatpush1.msra.mxu0 %v280
        %616 = vmatprep.subr.mxu0 0.0
        %617 = vmatpush1.msra.mxu0 %v279
        %618 = vmatprep.subr.mxu0 0.0
        %619 = vmatpush1.msra.mxu0 %v278
        %620 = vmatprep.subr.mxu0 0.0
        %621 = vmatpush1.msra.mxu0 %v277
        %622 = vmatprep.subr.mxu0 0.0
        %623 = vmatpush1.msra.mxu0 %v276
        %624 = vmatprep.subr.mxu0 0.0
        %625 = vmatpush1.msra.mxu0 %v275
        %626 = vmatprep.subr.mxu0 0.0
        %627 = vmatpush1.msra.mxu0 %v274
        %628 = vmatprep.subr.mxu0 0.0
        %629 = vmatpush1.msra.mxu0 %v273
        %630 = vmatprep.subr.mxu0 0.0
        %631 = vmatpush1.msra.mxu0 %v272
        %632 = vmatprep.subr.mxu0 0.0
        %633 = vmatpush1.msra.mxu0 %v271
        %634 = vmatprep.subr.mxu0 0.0
        %635 = vmatpush1.msra.mxu0 %v270
        %636 = vmatprep.subr.mxu0 0.0
        %637 = vmatpush1.msra.mxu0 %v269
        %638 = vmatprep.subr.mxu0 0.0
        %639 = vmatpush1.msra.mxu0 %v268
        %640 = vmatprep.subr.mxu0 0.0
        %641 = vmatpush2.msra.mxu0 0.0
        %642 = vmatprep.subr.mxu0 0.0
        %643 = vmatpush2.msra.mxu0 0.0
        %644 = vmatprep.subr.mxu0 0.0
        %645 = vmatpush2.msra.mxu0 0.0
        %646 = vmatprep.subr.mxu0 0.0
        %647 = vmatpush2.msra.mxu0 0.0
        %648 = vmatprep.subr.mxu0 0.0
        %649 = vmatpush2.msra.mxu0 0.0
        %650 = vmatprep.subr.mxu0 0.0
        %651 = vmatpush2.msra.mxu0 0.0
        %652 = vmatprep.subr.mxu0 0.0
        %653 = vmatpush2.msra.mxu0 0.0
        %654 = vmatprep.subr.mxu0 0.0
        %655 = vmatpush2.msra.mxu0 0.0
        %656 = vmatprep.subr.mxu0 0.0
        %657 = vmatpush2.msra.mxu0 0.0
        %658 = vmatprep.subr.mxu0 0.0
        %659 = vmatpush2.msra.mxu0 0.0
        %660 = vmatprep.subr.mxu0 0.0
        %661 = vmatpush2.msra.mxu0 0.0
        %662 = vmatprep.subr.mxu0 0.0
        %663 = vmatpush2.msra.mxu0 0.0
        %664 = vmatprep.subr.mxu0 0.0
        %665 = vmatpush2.msra.mxu0 0.0
        %666 = vmatprep.subr.mxu0 0.0
        %667 = vmatpush2.msra.mxu0 0.0
        %668 = vmatprep.subr.mxu0 0.0
        %669 = vmatpush2.msra.mxu0 0.0
        %670 = vmatprep.subr.mxu0 0.0
        %671 = vmatpush2.msra.mxu0 0.0
        %672 = vmatprep.mubr.f32.mxu0 0.0
        %673 = vmatmul.mubr.f32.gmra.mxu0 %v533
        %v674 = vpop.f32.mrf.mxu0
        %v675 = vadd.f32 %v605, %v674
        %v676 = vpop.f32.mrf.mxu0
        %677 = vdwg.mxu0
        %v679 = vrot.slane %v249, 2
        %v681 = vadd.f32 %v675, %v679
        %v682 = vlaneseq
        %v683 = vshrl.u32 %v682, 7
        %v684 = vsub.s32 0, %v683
        %v685 = vrot.slane %v681, %v684
        %v687 = vsel %vm365, %v267, 0
        %689 = vmatprep.subr.mxu0 0.0
        %690 = vmatpush1.msra.mxu0 0.0
        %691 = vmatprep.subr.mxu0 0.0
        %692 = vmatpush1.msra.mxu0 0.0
        %693 = vmatprep.subr.mxu0 0.0
        %694 = vmatpush1.msra.mxu0 0.0
        %695 = vmatprep.subr.mxu0 0.0
        %696 = vmatpush1.msra.mxu0 0.0
        %697 = vmatprep.subr.mxu0 0.0
        %698 = vmatpush1.msra.mxu0 0.0
        %699 = vmatprep.subr.mxu0 0.0
        %700 = vmatpush1.msra.mxu0 0.0
        %701 = vmatprep.subr.mxu0 0.0
        %702 = vmatpush1.msra.mxu0 0.0
        %703 = vmatprep.subr.mxu0 0.0
        %704 = vmatpush1.msra.mxu0 0.0
        %705 = vmatprep.subr.mxu0 0.0
        %706 = vmatpush1.msra.mxu0 0.0
        %707 = vmatprep.subr.mxu0 0.0
        %708 = vmatpush1.msra.mxu0 0.0
        %709 = vmatprep.subr.mxu0 0.0
        %710 = vmatpush1.msra.mxu0 0.0
        %711 = vmatprep.subr.mxu0 0.0
        %712 = vmatpush1.msra.mxu0 0.0
        %713 = vmatprep.subr.mxu0 0.0
        %714 = vmatpush1.msra.mxu0 0.0
        %715 = vmatprep.subr.mxu0 0.0
        %716 = vmatpush1.msra.mxu0 0.0
        %717 = vmatprep.subr.mxu0 0.0
        %718 = vmatpush1.msra.mxu0 0.0
        %719 = vmatprep.subr.mxu0 0.0
        %720 = vmatpush1.msra.mxu0 %v687
        %721 = vmatprep.subr.mxu0 0.0
        %722 = vmatpush2.msra.mxu0 0.0
        %723 = vmatprep.subr.mxu0 0.0
        %724 = vmatpush2.msra.mxu0 0.0
        %725 = vmatprep.subr.mxu0 0.0
        %726 = vmatpush2.msra.mxu0 0.0
        %727 = vmatprep.subr.mxu0 0.0
        %728 = vmatpush2.msra.mxu0 0.0
        %729 = vmatprep.subr.mxu0 0.0
        %730 = vmatpush2.msra.mxu0 0.0
        %731 = vmatprep.subr.mxu0 0.0
        %732 = vmatpush2.msra.mxu0 0.0
        %733 = vmatprep.subr.mxu0 0.0
        %734 = vmatpush2.msra.mxu0 0.0
        %735 = vmatprep.subr.mxu0 0.0
        %736 = vmatpush2.msra.mxu0 0.0
        %737 = vmatprep.subr.mxu0 0.0
        %738 = vmatpush2.msra.mxu0 0.0
        %739 = vmatprep.subr.mxu0 0.0
        %740 = vmatpush2.msra.mxu0 0.0
        %741 = vmatprep.subr.mxu0 0.0
        %742 = vmatpush2.msra.mxu0 0.0
        %743 = vmatprep.subr.mxu0 0.0
        %744 = vmatpush2.msra.mxu0 0.0
        %745 = vmatprep.subr.mxu0 0.0
        %746 = vmatpush2.msra.mxu0 0.0
        %747 = vmatprep.subr.mxu0 0.0
        %748 = vmatpush2.msra.mxu0 0.0
        %749 = vmatprep.subr.mxu0 0.0
        %750 = vmatpush2.msra.mxu0 0.0
        %751 = vmatprep.subr.mxu0 0.0
        %752 = vmatpush2.msra.mxu0 0.0
        %753 = vmatprep.mubr.f32.mxu0 0.0
        %754 = vmatmul.mubr.f32.gmra.mxu0 %v360
        %v755 = vpop.f32.mrf.mxu0
        %v756 = vadd.f32 %v685, %v755
        %v757 = vpop.f32.mrf.mxu0
        %758 = vmatprep.mubr.f32.mxu0 0.0
        %759 = vmatmul.mubr.f32.gmra.mxu0 %v363
        %v760 = vpop.f32.mrf.mxu0
        %v761 = vadd.f32 %v685, %v760
        %v762 = vpop.f32.mrf.mxu0
        %763 = vdwg.mxu0
        %v764 = vmax.f32 %v756, 0.0
        %v765 = vmax.f32 %v761, 0.0
        %v766 = vlaneseq
        %v767 = vshrl.u32 %v766, 7
        %v768 = vsub.s32 0, %v767
        %v769 = vrot.slane %v350, %v768
        %770 = vmatprep.subr.mxu0 0.0
        %771 = vmatpush1.msra.mxu0 %v333
        %772 = vmatprep.subr.mxu0 0.0
        %773 = vmatpush1.msra.mxu0 %v332
        %774 = vmatprep.subr.mxu0 0.0
        %775 = vmatpush1.msra.mxu0 %v331
        %776 = vmatprep.subr.mxu0 0.0
        %777 = vmatpush1.msra.mxu0 %v330
        %778 = vmatprep.subr.mxu0 0.0
        %779 = vmatpush1.msra.mxu0 %v329
        %780 = vmatprep.subr.mxu0 0.0
        %781 = vmatpush1.msra.mxu0 %v328
        %782 = vmatprep.subr.mxu0 0.0
        %783 = vmatpush1.msra.mxu0 %v327
        %784 = vmatprep.subr.mxu0 0.0
        %785 = vmatpush1.msra.mxu0 %v326
        %786 = vmatprep.subr.mxu0 0.0
        %787 = vmatpush1.msra.mxu0 %v325
        %788 = vmatprep.subr.mxu0 0.0
        %789 = vmatpush1.msra.mxu0 %v324
        %790 = vmatprep.subr.mxu0 0.0
        %791 = vmatpush1.msra.mxu0 %v323
        %792 = vmatprep.subr.mxu0 0.0
        %793 = vmatpush1.msra.mxu0 %v322
        %794 = vmatprep.subr.mxu0 0.0
        %795 = vmatpush1.msra.mxu0 %v321
        %796 = vmatprep.subr.mxu0 0.0
        %797 = vmatpush1.msra.mxu0 %v320
        %798 = vmatprep.subr.mxu0 0.0
        %799 = vmatpush1.msra.mxu0 %v319
        %800 = vmatprep.subr.mxu0 0.0
        %801 = vmatpush1.msra.mxu0 %v318
        %802 = vmatprep.subr.mxu0 0.0
        %803 = vmatpush2.msra.mxu0 0.0
        %804 = vmatprep.subr.mxu0 0.0
        %805 = vmatpush2.msra.mxu0 0.0
        %806 = vmatprep.subr.mxu0 0.0
        %807 = vmatpush2.msra.mxu0 0.0
        %808 = vmatprep.subr.mxu0 0.0
        %809 = vmatpush2.msra.mxu0 0.0
        %810 = vmatprep.subr.mxu0 0.0
        %811 = vmatpush2.msra.mxu0 0.0
        %812 = vmatprep.subr.mxu0 0.0
        %813 = vmatpush2.msra.mxu0 0.0
        %814 = vmatprep.subr.mxu0 0.0
        %815 = vmatpush2.msra.mxu0 0.0
        %816 = vmatprep.subr.mxu0 0.0
        %817 = vmatpush2.msra.mxu0 0.0
        %818 = vmatprep.subr.mxu0 0.0
        %819 = vmatpush2.msra.mxu0 0.0
        %820 = vmatprep.subr.mxu0 0.0
        %821 = vmatpush2.msra.mxu0 0.0
        %822 = vmatprep.subr.mxu0 0.0
        %823 = vmatpush2.msra.mxu0 0.0
        %824 = vmatprep.subr.mxu0 0.0
        %825 = vmatpush2.msra.mxu0 0.0
        %826 = vmatprep.subr.mxu0 0.0
        %827 = vmatpush2.msra.mxu0 0.0
        %828 = vmatprep.subr.mxu0 0.0
        %829 = vmatpush2.msra.mxu0 0.0
        %830 = vmatprep.subr.mxu0 0.0
        %831 = vmatpush2.msra.mxu0 0.0
        %832 = vmatprep.subr.mxu0 0.0
        %833 = vmatpush2.msra.mxu0 0.0
        %834 = vmatprep.mubr.f32.mxu0 0.0
        %835 = vmatmul.mubr.f32.gmra.mxu0 %v764
        %v836 = vpop.f32.mrf.mxu0
        %v837 = vadd.f32 %v769, %v836
        %v838 = vpop.f32.mrf.mxu0
        %839 = vmatprep.mubr.f32.mxu0 0.0
        %840 = vmatmul.mubr.f32.gmra.mxu0 %v765
        %v841 = vpop.f32.mrf.mxu0
        %v842 = vadd.f32 %v769, %v841
        %v843 = vpop.f32.mrf.mxu0
        %844 = vdwg.mxu0
        %v845 = vadd.f32 %v351, %v837
        %v846 = vadd.f32 %v352, %v842
        %847 = vst.msk [vmem:[%s248] sm:$0xff] %vm358, %v845
        %848 = vst.msk [vmem:[%s248 + $0x8] sm:$0xff] %vm358, %v846
        %v849 = vlaneseq
        %v850 = vshrl.u32 %v849, 7
        %v851 = vsub.s32 3, %v850
        %v852 = vrot.slane %v249, %v851
        %v854 = vsel %vm358, %v845, 0
        %v857 = vsel %vm358, %v846, 0
        %v860 = vsel %vm365, %v285, 0
        %862 = vmatprep.subr.mxu0 0.0
        %863 = vmatpush1.msra.mxu0 0.0
        %864 = vmatprep.subr.mxu0 0.0
        %865 = vmatpush1.msra.mxu0 0.0
        %866 = vmatprep.subr.mxu0 0.0
        %867 = vmatpush1.msra.mxu0 0.0
        %868 = vmatprep.subr.mxu0 0.0
        %869 = vmatpush1.msra.mxu0 0.0
        %870 = vmatprep.subr.mxu0 0.0
        %871 = vmatpush1.msra.mxu0 0.0
        %872 = vmatprep.subr.mxu0 0.0
        %873 = vmatpush1.msra.mxu0 0.0
        %874 = vmatprep.subr.mxu0 0.0
        %875 = vmatpush1.msra.mxu0 0.0
        %876 = vmatprep.subr.mxu0 0.0
        %877 = vmatpush1.msra.mxu0 0.0
        %878 = vmatprep.subr.mxu0 0.0
        %879 = vmatpush1.msra.mxu0 0.0
        %880 = vmatprep.subr.mxu0 0.0
        %881 = vmatpush1.msra.mxu0 0.0
        %882 = vmatprep.subr.mxu0 0.0
        %883 = vmatpush1.msra.mxu0 0.0
        %884 = vmatprep.subr.mxu0 0.0
        %885 = vmatpush1.msra.mxu0 0.0
        %886 = vmatprep.subr.mxu0 0.0
        %887 = vmatpush1.msra.mxu0 0.0
        %888 = vmatprep.subr.mxu0 0.0
        %889 = vmatpush1.msra.mxu0 0.0
        %890 = vmatprep.subr.mxu0 0.0
        %891 = vmatpush1.msra.mxu0 0.0
        %892 = vmatprep.subr.mxu0 0.0
        %893 = vmatpush1.msra.mxu0 %v860
        %894 = vmatprep.subr.mxu0 0.0
        %895 = vmatpush2.msra.mxu0 0.0
        %896 = vmatprep.subr.mxu0 0.0
        %897 = vmatpush2.msra.mxu0 0.0
        %898 = vmatprep.subr.mxu0 0.0
        %899 = vmatpush2.msra.mxu0 0.0
        %900 = vmatprep.subr.mxu0 0.0
        %901 = vmatpush2.msra.mxu0 0.0
        %902 = vmatprep.subr.mxu0 0.0
        %903 = vmatpush2.msra.mxu0 0.0
        %904 = vmatprep.subr.mxu0 0.0
        %905 = vmatpush2.msra.mxu0 0.0
        %906 = vmatprep.subr.mxu0 0.0
        %907 = vmatpush2.msra.mxu0 0.0
        %908 = vmatprep.subr.mxu0 0.0
        %909 = vmatpush2.msra.mxu0 0.0
        %910 = vmatprep.subr.mxu0 0.0
        %911 = vmatpush2.msra.mxu0 0.0
        %912 = vmatprep.subr.mxu0 0.0
        %913 = vmatpush2.msra.mxu0 0.0
        %914 = vmatprep.subr.mxu0 0.0
        %915 = vmatpush2.msra.mxu0 0.0
        %916 = vmatprep.subr.mxu0 0.0
        %917 = vmatpush2.msra.mxu0 0.0
        %918 = vmatprep.subr.mxu0 0.0
        %919 = vmatpush2.msra.mxu0 0.0
        %920 = vmatprep.subr.mxu0 0.0
        %921 = vmatpush2.msra.mxu0 0.0
        %922 = vmatprep.subr.mxu0 0.0
        %923 = vmatpush2.msra.mxu0 0.0
        %924 = vmatprep.subr.mxu0 0.0
        %925 = vmatpush2.msra.mxu0 0.0
        %926 = vmatprep.mubr.f32.mxu0 0.0
        %927 = vmatmul.mubr.f32.gmra.mxu0 %v854
        %v928 = vpop.f32.mrf.mxu0
        %v929 = vadd.f32 %v852, %v928
        %v930 = vpop.f32.mrf.mxu0
        %931 = vmatprep.mubr.f32.mxu0 0.0
        %932 = vmatmul.mubr.f32.gmra.mxu0 %v857
        %v933 = vpop.f32.mrf.mxu0
        %v934 = vadd.f32 %v852, %v933
        %v935 = vpop.f32.mrf.mxu0
        %936 = vdwg.mxu0
        %v937 = vmax.f32 %v929, 0.0
        %v938 = vmax.f32 %v934, 0.0
        %v939 = vlaneseq
        %v940 = vshrl.u32 %v939, 7
        %v941 = vsub.s32 4, %v940
        %v942 = vrot.slane %v249, %v941
        %943 = vmatprep.subr.mxu0 0.0
        %944 = vmatpush1.msra.mxu0 %v301
        %945 = vmatprep.subr.mxu0 0.0
        %946 = vmatpush1.msra.mxu0 %v300
        %947 = vmatprep.subr.mxu0 0.0
        %948 = vmatpush1.msra.mxu0 %v299
        %949 = vmatprep.subr.mxu0 0.0
        %950 = vmatpush1.msra.mxu0 %v298
        %951 = vmatprep.subr.mxu0 0.0
        %952 = vmatpush1.msra.mxu0 %v297
        %953 = vmatprep.subr.mxu0 0.0
        %954 = vmatpush1.msra.mxu0 %v296
        %955 = vmatprep.subr.mxu0 0.0
        %956 = vmatpush1.msra.mxu0 %v295
        %957 = vmatprep.subr.mxu0 0.0
        %958 = vmatpush1.msra.mxu0 %v294
        %959 = vmatprep.subr.mxu0 0.0
        %960 = vmatpush1.msra.mxu0 %v293
        %961 = vmatprep.subr.mxu0 0.0
        %962 = vmatpush1.msra.mxu0 %v292
        %963 = vmatprep.subr.mxu0 0.0
        %964 = vmatpush1.msra.mxu0 %v291
        %965 = vmatprep.subr.mxu0 0.0
        %966 = vmatpush1.msra.mxu0 %v290
        %967 = vmatprep.subr.mxu0 0.0
        %968 = vmatpush1.msra.mxu0 %v289
        %969 = vmatprep.subr.mxu0 0.0
        %970 = vmatpush1.msra.mxu0 %v288
        %971 = vmatprep.subr.mxu0 0.0
        %972 = vmatpush1.msra.mxu0 %v287
        %973 = vmatprep.subr.mxu0 0.0
        %974 = vmatpush1.msra.mxu0 %v286
        %975 = vmatprep.subr.mxu0 0.0
        %976 = vmatpush2.msra.mxu0 0.0
        %977 = vmatprep.subr.mxu0 0.0
        %978 = vmatpush2.msra.mxu0 0.0
        %979 = vmatprep.subr.mxu0 0.0
        %980 = vmatpush2.msra.mxu0 0.0
        %981 = vmatprep.subr.mxu0 0.0
        %982 = vmatpush2.msra.mxu0 0.0
        %983 = vmatprep.subr.mxu0 0.0
        %984 = vmatpush2.msra.mxu0 0.0
        %985 = vmatprep.subr.mxu0 0.0
        %986 = vmatpush2.msra.mxu0 0.0
        %987 = vmatprep.subr.mxu0 0.0
        %988 = vmatpush2.msra.mxu0 0.0
        %989 = vmatprep.subr.mxu0 0.0
        %990 = vmatpush2.msra.mxu0 0.0
        %991 = vmatprep.subr.mxu0 0.0
        %992 = vmatpush2.msra.mxu0 0.0
        %993 = vmatprep.subr.mxu0 0.0
        %994 = vmatpush2.msra.mxu0 0.0
        %995 = vmatprep.subr.mxu0 0.0
        %996 = vmatpush2.msra.mxu0 0.0
        %997 = vmatprep.subr.mxu0 0.0
        %998 = vmatpush2.msra.mxu0 0.0
        %999 = vmatprep.subr.mxu0 0.0
        %1000 = vmatpush2.msra.mxu0 0.0
        %1001 = vmatprep.subr.mxu0 0.0
        %1002 = vmatpush2.msra.mxu0 0.0
        %1003 = vmatprep.subr.mxu0 0.0
        %1004 = vmatpush2.msra.mxu0 0.0
        %1005 = vmatprep.subr.mxu0 0.0
        %1006 = vmatpush2.msra.mxu0 0.0
        %1007 = vmatprep.mubr.f32.mxu0 0.0
        %1008 = vmatmul.mubr.f32.gmra.mxu0 %v937
        %v1009 = vpop.f32.mrf.mxu0
        %v1010 = vadd.f32 %v942, %v1009
        %v1011 = vpop.f32.mrf.mxu0
        %1012 = vmatprep.mubr.f32.mxu0 0.0
        %1013 = vmatmul.mubr.f32.gmra.mxu0 %v938
        %v1014 = vpop.f32.mrf.mxu0
        %v1015 = vadd.f32 %v942, %v1014
        %v1016 = vpop.f32.mrf.mxu0
        %1017 = vdwg.mxu0
        %v1018 = vmax.f32 %v1010, 0.0
        %v1019 = vmax.f32 %v1015, 0.0
        %v1020 = vmax.f32 %v1018, %v1019
        %v1021 = vrot.slane %v1020, 4
        %v1022 = vmax.f32 %v1020, %v1021
        %v1023 = vrot.slane %v1022, 2
        %v1024 = vmax.f32 %v1022, %v1023
        %v1025 = vrot.slane %v1024, 1
        %v1026 = vmax.f32 %v1024, %v1025
        %v1027 = vrot.slane %v249, 5
        %1029 = vmatprep.subr.mxu0 0.0
        %1030 = vmatpush1.msra.mxu0 %v317
        %1031 = vmatprep.subr.mxu0 0.0
        %1032 = vmatpush1.msra.mxu0 %v316
        %1033 = vmatprep.subr.mxu0 0.0
        %1034 = vmatpush1.msra.mxu0 %v315
        %1035 = vmatprep.subr.mxu0 0.0
        %1036 = vmatpush1.msra.mxu0 %v314
        %1037 = vmatprep.subr.mxu0 0.0
        %1038 = vmatpush1.msra.mxu0 %v313
        %1039 = vmatprep.subr.mxu0 0.0
        %1040 = vmatpush1.msra.mxu0 %v312
        %1041 = vmatprep.subr.mxu0 0.0
        %1042 = vmatpush1.msra.mxu0 %v311
        %1043 = vmatprep.subr.mxu0 0.0
        %1044 = vmatpush1.msra.mxu0 %v310
        %1045 = vmatprep.subr.mxu0 0.0
        %1046 = vmatpush1.msra.mxu0 %v309
        %1047 = vmatprep.subr.mxu0 0.0
        %1048 = vmatpush1.msra.mxu0 %v308
        %1049 = vmatprep.subr.mxu0 0.0
        %1050 = vmatpush1.msra.mxu0 %v307
        %1051 = vmatprep.subr.mxu0 0.0
        %1052 = vmatpush1.msra.mxu0 %v306
        %1053 = vmatprep.subr.mxu0 0.0
        %1054 = vmatpush1.msra.mxu0 %v305
        %1055 = vmatprep.subr.mxu0 0.0
        %1056 = vmatpush1.msra.mxu0 %v304
        %1057 = vmatprep.subr.mxu0 0.0
        %1058 = vmatpush1.msra.mxu0 %v303
        %1059 = vmatprep.subr.mxu0 0.0
        %1060 = vmatpush1.msra.mxu0 %v302
        %1061 = vmatprep.subr.mxu0 0.0
        %1062 = vmatpush2.msra.mxu0 0.0
        %1063 = vmatprep.subr.mxu0 0.0
        %1064 = vmatpush2.msra.mxu0 0.0
        %1065 = vmatprep.subr.mxu0 0.0
        %1066 = vmatpush2.msra.mxu0 0.0
        %1067 = vmatprep.subr.mxu0 0.0
        %1068 = vmatpush2.msra.mxu0 0.0
        %1069 = vmatprep.subr.mxu0 0.0
        %1070 = vmatpush2.msra.mxu0 0.0
        %1071 = vmatprep.subr.mxu0 0.0
        %1072 = vmatpush2.msra.mxu0 0.0
        %1073 = vmatprep.subr.mxu0 0.0
        %1074 = vmatpush2.msra.mxu0 0.0
        %1075 = vmatprep.subr.mxu0 0.0
        %1076 = vmatpush2.msra.mxu0 0.0
        %1077 = vmatprep.subr.mxu0 0.0
        %1078 = vmatpush2.msra.mxu0 0.0
        %1079 = vmatprep.subr.mxu0 0.0
        %1080 = vmatpush2.msra.mxu0 0.0
        %1081 = vmatprep.subr.mxu0 0.0
        %1082 = vmatpush2.msra.mxu0 0.0
        %1083 = vmatprep.subr.mxu0 0.0
        %1084 = vmatpush2.msra.mxu0 0.0
        %1085 = vmatprep.subr.mxu0 0.0
        %1086 = vmatpush2.msra.mxu0 0.0
        %1087 = vmatprep.subr.mxu0 0.0
        %1088 = vmatpush2.msra.mxu0 0.0
        %1089 = vmatprep.subr.mxu0 0.0
        %1090 = vmatpush2.msra.mxu0 0.0
        %1091 = vmatprep.subr.mxu0 0.0
        %1092 = vmatpush2.msra.mxu0 0.0
        %1093 = vmatprep.mubr.f32.mxu0 0.0
        %1094 = vmatmul.mubr.f32.gmra.mxu0 %v1026
        %v1095 = vpop.f32.mrf.mxu0
        %v1096 = vadd.f32 %v1027, %v1095
        %v1097 = vpop.f32.mrf.mxu0
        %1098 = vdwg.mxu0
        %v1099 = vmax.f32 %v1096, 0.0
        %v1101 = vrot.slane %v350, 1
        %1103 = vmatprep.subr.mxu0 0.0
        %1104 = vmatpush1.msra.mxu0 %v349
        %1105 = vmatprep.subr.mxu0 0.0
        %1106 = vmatpush1.msra.mxu0 %v348
        %1107 = vmatprep.subr.mxu0 0.0
        %1108 = vmatpush1.msra.mxu0 %v347
        %1109 = vmatprep.subr.mxu0 0.0
        %1110 = vmatpush1.msra.mxu0 %v346
        %1111 = vmatprep.subr.mxu0 0.0
        %1112 = vmatpush1.msra.mxu0 %v345
        %1113 = vmatprep.subr.mxu0 0.0
        %1114 = vmatpush1.msra.mxu0 %v344
        %1115 = vmatprep.subr.mxu0 0.0
        %1116 = vmatpush1.msra.mxu0 %v343
        %1117 = vmatprep.subr.mxu0 0.0
        %1118 = vmatpush1.msra.mxu0 %v342
        %1119 = vmatprep.subr.mxu0 0.0
        %1120 = vmatpush1.msra.mxu0 %v341
        %1121 = vmatprep.subr.mxu0 0.0
        %1122 = vmatpush1.msra.mxu0 %v340
        %1123 = vmatprep.subr.mxu0 0.0
        %1124 = vmatpush1.msra.mxu0 %v339
        %1125 = vmatprep.subr.mxu0 0.0
        %1126 = vmatpush1.msra.mxu0 %v338
        %1127 = vmatprep.subr.mxu0 0.0
        %1128 = vmatpush1.msra.mxu0 %v337
        %1129 = vmatprep.subr.mxu0 0.0
        %1130 = vmatpush1.msra.mxu0 %v336
        %1131 = vmatprep.subr.mxu0 0.0
        %1132 = vmatpush1.msra.mxu0 %v335
        %1133 = vmatprep.subr.mxu0 0.0
        %1134 = vmatpush1.msra.mxu0 %v334
        %1135 = vmatprep.subr.mxu0 0.0
        %1136 = vmatpush2.msra.mxu0 0.0
        %1137 = vmatprep.subr.mxu0 0.0
        %1138 = vmatpush2.msra.mxu0 0.0
        %1139 = vmatprep.subr.mxu0 0.0
        %1140 = vmatpush2.msra.mxu0 0.0
        %1141 = vmatprep.subr.mxu0 0.0
        %1142 = vmatpush2.msra.mxu0 0.0
        %1143 = vmatprep.subr.mxu0 0.0
        %1144 = vmatpush2.msra.mxu0 0.0
        %1145 = vmatprep.subr.mxu0 0.0
        %1146 = vmatpush2.msra.mxu0 0.0
        %1147 = vmatprep.subr.mxu0 0.0
        %1148 = vmatpush2.msra.mxu0 0.0
        %1149 = vmatprep.subr.mxu0 0.0
        %1150 = vmatpush2.msra.mxu0 0.0
        %1151 = vmatprep.subr.mxu0 0.0
        %1152 = vmatpush2.msra.mxu0 0.0
        %1153 = vmatprep.subr.mxu0 0.0
        %1154 = vmatpush2.msra.mxu0 0.0
        %1155 = vmatprep.subr.mxu0 0.0
        %1156 = vmatpush2.msra.mxu0 0.0
        %1157 = vmatprep.subr.mxu0 0.0
        %1158 = vmatpush2.msra.mxu0 0.0
        %1159 = vmatprep.subr.mxu0 0.0
        %1160 = vmatpush2.msra.mxu0 0.0
        %1161 = vmatprep.subr.mxu0 0.0
        %1162 = vmatpush2.msra.mxu0 0.0
        %1163 = vmatprep.subr.mxu0 0.0
        %1164 = vmatpush2.msra.mxu0 0.0
        %1165 = vmatprep.subr.mxu0 0.0
        %1166 = vmatpush2.msra.mxu0 0.0
        %1167 = vmatprep.mubr.f32.mxu0 0.0
        %1168 = vmatmul.mubr.f32.gmra.mxu0 %v1099
        %v1169 = vpop.f32.mrf.mxu0
        %v1170 = vadd.f32 %v1101, %v1169
        %v1171 = vpop.f32.mrf.mxu0
        %1172 = vdwg.mxu0
        %vm1173 = vcmask 57344
        %1174 = vst.msk [vmem:[%s235] sm:$0x1] %vm1173, %v1170
        %p1175 = scmp.lt.s32.totalorder %s20, 1
        %s1176 = scalar_select %p1175, %s20, 1
        %s1177 = smul.addr %s1176, 2
        %s1178 = smul.addr %s1177, 8
        %s1179 = scalar_lea.vmem %s4, %s1178
        %s1180 = sand.u32 %s148, 1
        %s1181 = scalar_lea.sflag [#allocation3], %s1180
        %s1182 = sand.u32 %s148, 1
        %s1183 = scalar_lea.vmem [#allocation2], %s1182
        // Predicated region
        $region37: #{pointnet2_ed.1} parent=35 // pred_check
          %p1184 = pneg %p132
        $region38: #{pointnet2_ed.1} parent=35 // pred_check_branch
          %1186 = sbr.rel (%p1184) target = $region40
        $region39: #{pointnet2_ed.1} parent=35 // pred_region
          _
        $region40: #{pointnet2_ed.1} parent=35 // pred_fallthru
          _
        // Predicated region
        $region41: #{pointnet2_ed.1} parent=35 // pred_check
          %p1187 = pneg %p158
        $region42: #{pointnet2_ed.1} parent=35 // pred_check_branch
          %1189 = sbr.rel (%p1187) target = $region44
        $region43: #{pointnet2_ed.1} parent=35 // pred_region
          %s1191 = ssub.s32 16, 16
          %1192 = vsyncadd %s1181, %s1191
          %s1193 = smul.addr %s20, 16
          %s1194 = scalar_lea.hbm %s5, %s1193
          %s1196 = sshll.u32 %s1183, 4
          %s1197 = int_to_ptr.vmem [resolvable:$true] %s1196
          %1199 = dma.vmem_to_hbm [thread:$0]  %s1197, 16, %s1194, %s1181
        $region44: #{pointnet2_ed.1} parent=35 // pred_fallthru
          _
      $region36: #{pointnet2_ed.1} parent=5 // pred_fallthru
        _
      %p1200 = scmp.le.s32.totalorder 2, %s15
      // Predicated region
      $region45: #{pointnet2_ed.1} parent=5 // pred_check
        %p1201 = pneg %p1200
      $region46: #{pointnet2_ed.1} parent=5 // pred_check_branch
        %1203 = sbr.rel (%p1201) target = $region48
      $region47: #{pointnet2_ed.1} parent=5 // pred_region
        %s1204 = ssub.s32 %s15, 2
        // Predicated region
        $region49: #{pointnet2_ed.1} parent=47 // pred_check
          %p1205 = pneg %p138
        $region50: #{pointnet2_ed.1} parent=47 // pred_check_branch
          %1207 = sbr.rel (%p1205) target = $region52
        $region51: #{pointnet2_ed.1} parent=47 // pred_region
          %p1208 = scmp.lt.s32.totalorder %s21, 1
          %s1209 = scalar_select %p1208, %s21, 1
          %s1210 = smul.addr %s1209, 2
          %s1211 = smul.addr %s1210, 8
          %s1212 = scalar_lea.vmem %s4, %s1211
        $region52: #{pointnet2_ed.1} parent=47 // pred_fallthru
          _
        // Predicated region
        $region53: #{pointnet2_ed.1} parent=47 // pred_check
          %p1213 = pneg %p164
        $region54: #{pointnet2_ed.1} parent=47 // pred_check_branch
          %1215 = sbr.rel (%p1213) target = $region56
        $region55: #{pointnet2_ed.1} parent=47 // pred_region
          %s1216 = sand.u32 %s149, 1
          %s1217 = scalar_lea.sflag [#allocation3], %s1216
          %s1218 = sand.u32 %s149, 1
          %s1219 = scalar_lea.vmem [#allocation2], %s1218
          %1220 = dma.done %s1217, 16
        $region56: #{pointnet2_ed.1} parent=47 // pred_fallthru
          _
      $region48: #{pointnet2_ed.1} parent=5 // pred_fallthru
        _
    $region6: #{pointnet2_ed.1} parent=1 // loop_footer
      %s19 = sadd.s32 1, %s15
    $region7: #{pointnet2_ed.1} parent=1 // loop_footer_branch
      %14 = sbr.rel target = $region3
    $region8: #{pointnet2_ed.1} parent=1 // loop_exit
      _
    %1221 = vsyncpa [#allocation3], 1
    %s1222 = scalar_lea.sflag [#allocation3], 1
    %1223 = vsyncpa %s1222, 1

</llo_original>
